<compile_context>
chip_gen: v5e
topology: v5e:2x2
jax: 0.10.0
libtpu: 0.0.40
codegen_flags: <defaults>
</compile_context>

<pallas_src>
import jax
import jax.numpy as jnp
from jax.experimental import pallas as pl
from jax.experimental.pallas import tpu as pltpu


_VMEM = pl.BlockSpec(memory_space=pltpu.MemorySpace.VMEM)


def _round_up(n, m):
    return ((n + m - 1) // m) * m


# ----------------------------- fused single-call kernel -----------------------------

def _make_seq2seq_kernel(T_in, T_out, B, H):
    """Builds the fused encoder->decoder->classifier kernel (shapes baked in via closure)."""

    def kernel(enc_x_ref, dec_x_ref,
               enc_wi_ref, enc_wh_ref, enc_bi_ref, enc_bhn_ref,
               dec_wi_ref, dec_wh_ref, dec_bi_ref, dec_bhn_ref,
               clf_w_ref, clf_b_ref,
               logits_ref, h_all_scr):
        dot = lambda a, b: jnp.dot(a, b, preferred_element_type=jnp.float32)

        def run_gru(xp, wh, bhn, h, T, sink=None):
            # xp : (T*B, GP) precomputed input projection with folded biases
            #      lanes [0:H)=r, [H:2H)=z, [2H:3H)=n
            # wh : (H, GP) fused recurrent weights, bhn : (1, H)
            for t in range(T):                                    # static unroll
                xp_t = xp[t * B:(t + 1) * B, :]
                hp = dot(h, wh)                                   # single MXU call / step
                rz = jax.nn.sigmoid(xp_t[:, :2 * H] + hp[:, :2 * H])
                r = rz[:, :H]
                z = rz[:, H:2 * H]
                n = jnp.tanh(xp_t[:, 2 * H:3 * H]
                             + r * (hp[:, 2 * H:3 * H] + bhn))
                h = (1.0 - z) * n + z * h
                if sink is not None:
                    sink[t * B:(t + 1) * B, :] = h
            return h

        # ---- encoder: hoisted x-projection + recurrence (h0 = zeros, PyTorch default) ----
        enc_xp = dot(enc_x_ref[...], enc_wi_ref[...]) + enc_bi_ref[...]
        h0 = jnp.zeros((B, H), jnp.float32)
        h = run_gru(enc_xp, enc_wh_ref[...], enc_bhn_ref[...], h0, T_in)

        # ---- decoder, seeded with encoder hidden (stays in registers) ----
        dec_xp = dot(dec_x_ref[...], dec_wi_ref[...]) + dec_bi_ref[...]
        run_gru(dec_xp, dec_wh_ref[...], dec_bhn_ref[...], h, T_out, sink=h_all_scr)

        # ---- classifier: one batched, lane-dense matmul over all decoder steps ----
        logits_ref[...] = dot(h_all_scr[...], clf_w_ref[...]) + clf_b_ref[...]

    return kernel


# ----------------------------- param fusion (plain-JAX glue) -----------------------------

def _fuse_gru_params(gru, lane_pad):
    """Concat r|z|n gate weights along the lane dim and zero-pad to `lane_pad` lanes.
    Folds b_hr/b_hz into the x-projection bias; b_hn stays separate (inside r*(.))."""
    def pad(a):
        return jnp.pad(a, ((0, 0), (0, lane_pad - a.shape[1])))
    wi = pad(jnp.concatenate([gru["wir"], gru["wiz"], gru["win"]], axis=1))
    wh = pad(jnp.concatenate([gru["whr"], gru["whz"], gru["whn"]], axis=1))
    bi = pad(jnp.concatenate([gru["bir"] + gru["bhr"],
                              gru["biz"] + gru["bhz"],
                              gru["bin"]], axis=1))
    return wi, wh, bi, gru["bhn"]


# ----------------------------- forward wrapper -----------------------------

def date_normalizer_forward(params, input_seq, output_seq):
    """Training-mode forward of DateNormalizer.
    input_seq: (B, T_in) int32, output_seq: (B, T_out) int32
    returns logits (B, T_out, output_vocab_len) float32 — same as PyTorch."""
    B, T_in = input_seq.shape
    _, T_out = output_seq.shape
    E = params["enc_emb"].shape[1]
    H = params["enc_gru"]["whr"].shape[0]
    V = params["clf_w"].shape[1]
    GP = max(_round_up(3 * H, 128), 128)        # fused-gate lane width
    VP = max(_round_up(V, 128), 128)            # lane-dense logits width

    # embedding gathers + time-major flatten (row index = t*B + b)
    enc_x2d = jnp.transpose(params["enc_emb"][input_seq], (1, 0, 2)).reshape(T_in * B, E)
    dec_x2d = jnp.transpose(params["dec_emb"][output_seq], (1, 0, 2)).reshape(T_out * B, E)

    enc_wi, enc_wh, enc_bi, enc_bhn = _fuse_gru_params(params["enc_gru"], GP)
    dec_wi, dec_wh, dec_bi, dec_bhn = _fuse_gru_params(params["dec_gru"], GP)
    clf_w = jnp.pad(params["clf_w"], ((0, 0), (0, VP - V)))
    clf_b = jnp.pad(params["clf_b"], ((0, 0), (0, VP - V)))

    ins = [enc_x2d, dec_x2d,
           enc_wi, enc_wh, enc_bi, enc_bhn,
           dec_wi, dec_wh, dec_bi, dec_bhn,
           clf_w, clf_b]

    logits2d = pl.pallas_call(
        _make_seq2seq_kernel(T_in, T_out, B, H),
        out_shape=jax.ShapeDtypeStruct((T_out * B, VP), jnp.float32),
        in_specs=[_VMEM] * len(ins),
        out_specs=_VMEM,
        scratch_shapes=[pltpu.VMEM((T_out * B, H), jnp.float32)],
    )(*ins)

    logits = logits2d[:, :V].reshape(T_out, B, V)   # drop lane padding
    return jnp.transpose(logits, (1, 0, 2))         # back to batch_first (B, T_out, V)


# ----------------------------- deterministic param init -----------------------------

def _init_gru_params(key, E, H):
    k = 1.0 / jnp.sqrt(H)
    keys = jax.random.split(key, 12)
    u = lambda kk, shape: jax.random.uniform(kk, shape, jnp.float32, -k, k)
    return {
        "wir": u(keys[0], (E, H)), "wiz": u(keys[1], (E, H)), "win": u(keys[2], (E, H)),
        "whr": u(keys[3], (H, H)), "whz": u(keys[4], (H, H)), "whn": u(keys[5], (H, H)),
        "bir": u(keys[6], (1, H)), "biz": u(keys[7], (1, H)), "bin": u(keys[8], (1, H)),
        "bhr": u(keys[9], (1, H)), "bhz": u(keys[10], (1, H)), "bhn": u(keys[11], (1, H)),
    }


def init_params(key, input_vocab_len, output_vocab_len, emb_size, hidden_size):
    ks = jax.random.split(key, 6)
    kc = 1.0 / jnp.sqrt(hidden_size)
    return {
        "enc_emb": jax.random.normal(ks[0], (input_vocab_len, emb_size), jnp.float32),
        "dec_emb": jax.random.normal(ks[1], (output_vocab_len, emb_size), jnp.float32),
        "enc_gru": _init_gru_params(ks[2], emb_size, hidden_size),
        "dec_gru": _init_gru_params(ks[3], emb_size, hidden_size),
        "clf_w": jax.random.uniform(ks[4], (hidden_size, output_vocab_len),
                                    jnp.float32, -kc, kc),
        "clf_b": jax.random.uniform(ks[5], (1, output_vocab_len),
                                    jnp.float32, -kc, kc),
    }


# ----------------------- pure-JAX reference (independent per-gate math) -----------------------

def _gru_ref(x_bte, h0, gru):
    def step(h, x_t):
        r = jax.nn.sigmoid(x_t @ gru["wir"] + gru["bir"] + h @ gru["whr"] + gru["bhr"])
        z = jax.nn.sigmoid(x_t @ gru["wiz"] + gru["biz"] + h @ gru["whz"] + gru["bhz"])
        n = jnp.tanh(x_t @ gru["win"] + gru["bin"] + r * (h @ gru["whn"] + gru["bhn"]))
        h_new = (1.0 - z) * n + z * h
        return h_new, h_new
    hT, outs = jax.lax.scan(step, h0, jnp.transpose(x_bte, (1, 0, 2)))
    return jnp.transpose(outs, (1, 0, 2)), hT


def date_normalizer_ref(params, input_seq, output_seq):
    enc_emb = params["enc_emb"][input_seq]
    dec_emb = params["dec_emb"][output_seq]
    B = input_seq.shape[0]
    H = params["enc_gru"]["whr"].shape[0]
    _, hidden = _gru_ref(enc_emb, jnp.zeros((B, H), jnp.float32), params["enc_gru"])
    out, _ = _gru_ref(dec_emb, hidden, params["dec_gru"])
    return jnp.einsum("bth,hv->btv", out, params["clf_w"]) + params["clf_b"][0]


# ----------------------------- main -----------------------------

if __name__ == "__main__":
    INPUT_VOCAB = 16
    OUTPUT_VOCAB = 12
    EMB = 32
    HIDDEN = 32
    EOS_ID = 0          # only used by the inference (greedy-decode) branch, not training forward
    B, T_IN, T_OUT = 2, 10, 8

    root = jax.random.PRNGKey(0)
    kp, ki, ko = jax.random.split(root, 3)
    params = init_params(kp, INPUT_VOCAB, OUTPUT_VOCAB, EMB, HIDDEN)

    input_seq = jax.random.randint(ki, (B, T_IN), 0, INPUT_VOCAB, dtype=jnp.int32)
    output_seq = jax.random.randint(ko, (B, T_OUT), 0, OUTPUT_VOCAB, dtype=jnp.int32)

    logits = jax.jit(date_normalizer_forward)(params, input_seq, output_seq)
    logits = jax.block_until_ready(logits)

    ref = date_normalizer_ref(params, input_seq, output_seq)
    assert logits.shape == (B, T_OUT, OUTPUT_VOCAB)
    assert jnp.allclose(logits, ref, atol=1e-4, rtol=1e-4), \
        float(jnp.max(jnp.abs(logits - ref)))

    # TODO(synk): the eval-mode greedy decode loop (while char != eos_id, argmax feedback,
    # host-side .item()) is data-dependent host control flow and is not implemented as a kernel.
    print("KERNEL_OK")
</pallas_src>

<mosaic_0001>
module attributes {stable_mosaic.version = 11 : i64} {
  func.func @kernel(%arg0: memref<20x32xf32, #tpu.memory_space<vmem>>, %arg1: memref<16x32xf32, #tpu.memory_space<vmem>>, %arg2: memref<32x128xf32, #tpu.memory_space<vmem>>, %arg3: memref<32x128xf32, #tpu.memory_space<vmem>>, %arg4: memref<1x128xf32, #tpu.memory_space<vmem>>, %arg5: memref<1x32xf32, #tpu.memory_space<vmem>>, %arg6: memref<32x128xf32, #tpu.memory_space<vmem>>, %arg7: memref<32x128xf32, #tpu.memory_space<vmem>>, %arg8: memref<1x128xf32, #tpu.memory_space<vmem>>, %arg9: memref<1x32xf32, #tpu.memory_space<vmem>>, %arg10: memref<32x128xf32, #tpu.memory_space<vmem>>, %arg11: memref<1x128xf32, #tpu.memory_space<vmem>>, %arg12: memref<16x128xf32, #tpu.memory_space<vmem>>, %arg13: memref<16x32xf32, #tpu.memory_space<vmem>>) attributes {dimension_semantics = [], scalar_prefetch = 0 : i64, scratch_operands = 1 : i64, tpu.core_type = #tpu.core_type<tc>} {
    %c0 = arith.constant 0 : index
    %c0_0 = arith.constant 0 : index
    %0 = vector.load %arg0[%c0, %c0_0] : memref<20x32xf32, #tpu.memory_space<vmem>>, vector<20x32xf32>
    %c0_1 = arith.constant 0 : index
    %c0_2 = arith.constant 0 : index
    %1 = vector.load %arg2[%c0_1, %c0_2] : memref<32x128xf32, #tpu.memory_space<vmem>>, vector<32x128xf32>
    %cst = arith.constant dense<0.000000e+00> : vector<20x128xf32>
    %2 = tpu.matmul %0, %1, %cst {dimension_numbers = #tpu.dot_dimension_numbers<[1], [0], [0], [1], [0, 0, 1, 1], [], []>} : vector<20x32xf32>, vector<32x128xf32>, vector<20x128xf32> -> vector<20x128xf32>
    %c0_3 = arith.constant 0 : index
    %c0_4 = arith.constant 0 : index
    %3 = vector.load %arg4[%c0_3, %c0_4] : memref<1x128xf32, #tpu.memory_space<vmem>>, vector<1x128xf32>
    %4 = vector.broadcast %3 : vector<1x128xf32> to vector<20x128xf32>
    %5 = arith.addf %2, %4 : vector<20x128xf32>
    %cst_5 = arith.constant 0.000000e+00 : f32
    %6 = vector.broadcast %cst_5 : f32 to vector<2x32xf32>
    %c0_6 = arith.constant 0 : index
    %c0_7 = arith.constant 0 : index
    %7 = vector.load %arg3[%c0_6, %c0_7] : memref<32x128xf32, #tpu.memory_space<vmem>>, vector<32x128xf32>
    %c0_8 = arith.constant 0 : index
    %c0_9 = arith.constant 0 : index
    %8 = vector.load %arg5[%c0_8, %c0_9] : memref<1x32xf32, #tpu.memory_space<vmem>>, vector<1x32xf32>
    %9 = vector.extract_strided_slice %5 {offsets = [0, 0], sizes = [2, 128], strides = [1, 1]} : vector<20x128xf32> to vector<2x128xf32>
    %cst_10 = arith.constant dense<0.000000e+00> : vector<2x128xf32>
    %10 = tpu.matmul %6, %7, %cst_10 {dimension_numbers = #tpu.dot_dimension_numbers<[1], [0], [0], [1], [0, 0, 1, 1], [], []>} : vector<2x32xf32>, vector<32x128xf32>, vector<2x128xf32> -> vector<2x128xf32>
    %11 = vector.extract_strided_slice %9 {offsets = [0, 0], sizes = [2, 64], strides = [1, 1]} : vector<2x128xf32> to vector<2x64xf32>
    %12 = vector.extract_strided_slice %10 {offsets = [0, 0], sizes = [2, 64], strides = [1, 1]} : vector<2x128xf32> to vector<2x64xf32>
    %13 = arith.addf %11, %12 : vector<2x64xf32>
    %14 = arith.negf %13 : vector<2x64xf32>
    %15 = math.exp %14 : vector<2x64xf32>
    %cst_11 = arith.constant 1.000000e+00 : f32
    %16 = vector.broadcast %cst_11 : f32 to vector<2x64xf32>
    %17 = arith.addf %16, %15 : vector<2x64xf32>
    %18 = arith.divf %16, %17 : vector<2x64xf32>
    %19 = vector.extract_strided_slice %18 {offsets = [0, 0], sizes = [2, 32], strides = [1, 1]} : vector<2x64xf32> to vector<2x32xf32>
    %20 = vector.extract_strided_slice %18 {offsets = [0, 32], sizes = [2, 32], strides = [1, 1]} : vector<2x64xf32> to vector<2x32xf32>
    %21 = vector.extract_strided_slice %9 {offsets = [0, 64], sizes = [2, 32], strides = [1, 1]} : vector<2x128xf32> to vector<2x32xf32>
    %22 = vector.extract_strided_slice %10 {offsets = [0, 64], sizes = [2, 32], strides = [1, 1]} : vector<2x128xf32> to vector<2x32xf32>
    %23 = vector.broadcast %8 : vector<1x32xf32> to vector<2x32xf32>
    %24 = arith.addf %22, %23 : vector<2x32xf32>
    %25 = arith.mulf %19, %24 : vector<2x32xf32>
    %26 = arith.addf %21, %25 : vector<2x32xf32>
    %27 = math.tanh %26 : vector<2x32xf32>
    %cst_12 = arith.constant 1.000000e+00 : f32
    %28 = vector.broadcast %cst_12 : f32 to vector<2x32xf32>
    %29 = arith.subf %28, %20 : vector<2x32xf32>
    %30 = arith.mulf %29, %27 : vector<2x32xf32>
    %31 = arith.mulf %20, %6 : vector<2x32xf32>
    %32 = arith.addf %30, %31 : vector<2x32xf32>
    %33 = vector.extract_strided_slice %5 {offsets = [2, 0], sizes = [2, 128], strides = [1, 1]} : vector<20x128xf32> to vector<2x128xf32>
    %cst_13 = arith.constant dense<0.000000e+00> : vector<2x128xf32>
    %34 = tpu.matmul %32, %7, %cst_13 {dimension_numbers = #tpu.dot_dimension_numbers<[1], [0], [0], [1], [0, 0, 1, 1], [], []>} : vector<2x32xf32>, vector<32x128xf32>, vector<2x128xf32> -> vector<2x128xf32>
    %35 = vector.extract_strided_slice %33 {offsets = [0, 0], sizes = [2, 64], strides = [1, 1]} : vector<2x128xf32> to vector<2x64xf32>
    %36 = vector.extract_strided_slice %34 {offsets = [0, 0], sizes = [2, 64], strides = [1, 1]} : vector<2x128xf32> to vector<2x64xf32>
    %37 = arith.addf %35, %36 : vector<2x64xf32>
    %38 = arith.negf %37 : vector<2x64xf32>
    %39 = math.exp %38 : vector<2x64xf32>
    %cst_14 = arith.constant 1.000000e+00 : f32
    %40 = vector.broadcast %cst_14 : f32 to vector<2x64xf32>
    %41 = arith.addf %40, %39 : vector<2x64xf32>
    %42 = arith.divf %40, %41 : vector<2x64xf32>
    %43 = vector.extract_strided_slice %42 {offsets = [0, 0], sizes = [2, 32], strides = [1, 1]} : vector<2x64xf32> to vector<2x32xf32>
    %44 = vector.extract_strided_slice %42 {offsets = [0, 32], sizes = [2, 32], strides = [1, 1]} : vector<2x64xf32> to vector<2x32xf32>
    %45 = vector.extract_strided_slice %33 {offsets = [0, 64], sizes = [2, 32], strides = [1, 1]} : vector<2x128xf32> to vector<2x32xf32>
    %46 = vector.extract_strided_slice %34 {offsets = [0, 64], sizes = [2, 32], strides = [1, 1]} : vector<2x128xf32> to vector<2x32xf32>
    %47 = vector.broadcast %8 : vector<1x32xf32> to vector<2x32xf32>
    %48 = arith.addf %46, %47 : vector<2x32xf32>
    %49 = arith.mulf %43, %48 : vector<2x32xf32>
    %50 = arith.addf %45, %49 : vector<2x32xf32>
    %51 = math.tanh %50 : vector<2x32xf32>
    %cst_15 = arith.constant 1.000000e+00 : f32
    %52 = vector.broadcast %cst_15 : f32 to vector<2x32xf32>
    %53 = arith.subf %52, %44 : vector<2x32xf32>
    %54 = arith.mulf %53, %51 : vector<2x32xf32>
    %55 = arith.mulf %44, %32 : vector<2x32xf32>
    %56 = arith.addf %54, %55 : vector<2x32xf32>
    %57 = vector.extract_strided_slice %5 {offsets = [4, 0], sizes = [2, 128], strides = [1, 1]} : vector<20x128xf32> to vector<2x128xf32>
    %cst_16 = arith.constant dense<0.000000e+00> : vector<2x128xf32>
    %58 = tpu.matmul %56, %7, %cst_16 {dimension_numbers = #tpu.dot_dimension_numbers<[1], [0], [0], [1], [0, 0, 1, 1], [], []>} : vector<2x32xf32>, vector<32x128xf32>, vector<2x128xf32> -> vector<2x128xf32>
    %59 = vector.extract_strided_slice %57 {offsets = [0, 0], sizes = [2, 64], strides = [1, 1]} : vector<2x128xf32> to vector<2x64xf32>
    %60 = vector.extract_strided_slice %58 {offsets = [0, 0], sizes = [2, 64], strides = [1, 1]} : vector<2x128xf32> to vector<2x64xf32>
    %61 = arith.addf %59, %60 : vector<2x64xf32>
    %62 = arith.negf %61 : vector<2x64xf32>
    %63 = math.exp %62 : vector<2x64xf32>
    %cst_17 = arith.constant 1.000000e+00 : f32
    %64 = vector.broadcast %cst_17 : f32 to vector<2x64xf32>
    %65 = arith.addf %64, %63 : vector<2x64xf32>
    %66 = arith.divf %64, %65 : vector<2x64xf32>
    %67 = vector.extract_strided_slice %66 {offsets = [0, 0], sizes = [2, 32], strides = [1, 1]} : vector<2x64xf32> to vector<2x32xf32>
    %68 = vector.extract_strided_slice %66 {offsets = [0, 32], sizes = [2, 32], strides = [1, 1]} : vector<2x64xf32> to vector<2x32xf32>
    %69 = vector.extract_strided_slice %57 {offsets = [0, 64], sizes = [2, 32], strides = [1, 1]} : vector<2x128xf32> to vector<2x32xf32>
    %70 = vector.extract_strided_slice %58 {offsets = [0, 64], sizes = [2, 32], strides = [1, 1]} : vector<2x128xf32> to vector<2x32xf32>
    %71 = vector.broadcast %8 : vector<1x32xf32> to vector<2x32xf32>
    %72 = arith.addf %70, %71 : vector<2x32xf32>
    %73 = arith.mulf %67, %72 : vector<2x32xf32>
    %74 = arith.addf %69, %73 : vector<2x32xf32>
    %75 = math.tanh %74 : vector<2x32xf32>
    %cst_18 = arith.constant 1.000000e+00 : f32
    %76 = vector.broadcast %cst_18 : f32 to vector<2x32xf32>
    %77 = arith.subf %76, %68 : vector<2x32xf32>
    %78 = arith.mulf %77, %75 : vector<2x32xf32>
    %79 = arith.mulf %68, %56 : vector<2x32xf32>
    %80 = arith.addf %78, %79 : vector<2x32xf32>
    %81 = vector.extract_strided_slice %5 {offsets = [6, 0], sizes = [2, 128], strides = [1, 1]} : vector<20x128xf32> to vector<2x128xf32>
    %cst_19 = arith.constant dense<0.000000e+00> : vector<2x128xf32>
    %82 = tpu.matmul %80, %7, %cst_19 {dimension_numbers = #tpu.dot_dimension_numbers<[1], [0], [0], [1], [0, 0, 1, 1], [], []>} : vector<2x32xf32>, vector<32x128xf32>, vector<2x128xf32> -> vector<2x128xf32>
    %83 = vector.extract_strided_slice %81 {offsets = [0, 0], sizes = [2, 64], strides = [1, 1]} : vector<2x128xf32> to vector<2x64xf32>
    %84 = vector.extract_strided_slice %82 {offsets = [0, 0], sizes = [2, 64], strides = [1, 1]} : vector<2x128xf32> to vector<2x64xf32>
    %85 = arith.addf %83, %84 : vector<2x64xf32>
    %86 = arith.negf %85 : vector<2x64xf32>
    %87 = math.exp %86 : vector<2x64xf32>
    %cst_20 = arith.constant 1.000000e+00 : f32
    %88 = vector.broadcast %cst_20 : f32 to vector<2x64xf32>
    %89 = arith.addf %88, %87 : vector<2x64xf32>
    %90 = arith.divf %88, %89 : vector<2x64xf32>
    %91 = vector.extract_strided_slice %90 {offsets = [0, 0], sizes = [2, 32], strides = [1, 1]} : vector<2x64xf32> to vector<2x32xf32>
    %92 = vector.extract_strided_slice %90 {offsets = [0, 32], sizes = [2, 32], strides = [1, 1]} : vector<2x64xf32> to vector<2x32xf32>
    %93 = vector.extract_strided_slice %81 {offsets = [0, 64], sizes = [2, 32], strides = [1, 1]} : vector<2x128xf32> to vector<2x32xf32>
    %94 = vector.extract_strided_slice %82 {offsets = [0, 64], sizes = [2, 32], strides = [1, 1]} : vector<2x128xf32> to vector<2x32xf32>
    %95 = vector.broadcast %8 : vector<1x32xf32> to vector<2x32xf32>
    %96 = arith.addf %94, %95 : vector<2x32xf32>
    %97 = arith.mulf %91, %96 : vector<2x32xf32>
    %98 = arith.addf %93, %97 : vector<2x32xf32>
    %99 = math.tanh %98 : vector<2x32xf32>
    %cst_21 = arith.constant 1.000000e+00 : f32
    %100 = vector.broadcast %cst_21 : f32 to vector<2x32xf32>
    %101 = arith.subf %100, %92 : vector<2x32xf32>
    %102 = arith.mulf %101, %99 : vector<2x32xf32>
    %103 = arith.mulf %92, %80 : vector<2x32xf32>
    %104 = arith.addf %102, %103 : vector<2x32xf32>
    %105 = vector.extract_strided_slice %5 {offsets = [8, 0], sizes = [2, 128], strides = [1, 1]} : vector<20x128xf32> to vector<2x128xf32>
    %cst_22 = arith.constant dense<0.000000e+00> : vector<2x128xf32>
    %106 = tpu.matmul %104, %7, %cst_22 {dimension_numbers = #tpu.dot_dimension_numbers<[1], [0], [0], [1], [0, 0, 1, 1], [], []>} : vector<2x32xf32>, vector<32x128xf32>, vector<2x128xf32> -> vector<2x128xf32>
    %107 = vector.extract_strided_slice %105 {offsets = [0, 0], sizes = [2, 64], strides = [1, 1]} : vector<2x128xf32> to vector<2x64xf32>
    %108 = vector.extract_strided_slice %106 {offsets = [0, 0], sizes = [2, 64], strides = [1, 1]} : vector<2x128xf32> to vector<2x64xf32>
    %109 = arith.addf %107, %108 : vector<2x64xf32>
    %110 = arith.negf %109 : vector<2x64xf32>
    %111 = math.exp %110 : vector<2x64xf32>
    %cst_23 = arith.constant 1.000000e+00 : f32
    %112 = vector.broadcast %cst_23 : f32 to vector<2x64xf32>
    %113 = arith.addf %112, %111 : vector<2x64xf32>
    %114 = arith.divf %112, %113 : vector<2x64xf32>
    %115 = vector.extract_strided_slice %114 {offsets = [0, 0], sizes = [2, 32], strides = [1, 1]} : vector<2x64xf32> to vector<2x32xf32>
    %116 = vector.extract_strided_slice %114 {offsets = [0, 32], sizes = [2, 32], strides = [1, 1]} : vector<2x64xf32> to vector<2x32xf32>
    %117 = vector.extract_strided_slice %105 {offsets = [0, 64], sizes = [2, 32], strides = [1, 1]} : vector<2x128xf32> to vector<2x32xf32>
    %118 = vector.extract_strided_slice %106 {offsets = [0, 64], sizes = [2, 32], strides = [1, 1]} : vector<2x128xf32> to vector<2x32xf32>
    %119 = vector.broadcast %8 : vector<1x32xf32> to vector<2x32xf32>
    %120 = arith.addf %118, %119 : vector<2x32xf32>
    %121 = arith.mulf %115, %120 : vector<2x32xf32>
    %122 = arith.addf %117, %121 : vector<2x32xf32>
    %123 = math.tanh %122 : vector<2x32xf32>
    %cst_24 = arith.constant 1.000000e+00 : f32
    %124 = vector.broadcast %cst_24 : f32 to vector<2x32xf32>
    %125 = arith.subf %124, %116 : vector<2x32xf32>
    %126 = arith.mulf %125, %123 : vector<2x32xf32>
    %127 = arith.mulf %116, %104 : vector<2x32xf32>
    %128 = arith.addf %126, %127 : vector<2x32xf32>
    %129 = vector.extract_strided_slice %5 {offsets = [10, 0], sizes = [2, 128], strides = [1, 1]} : vector<20x128xf32> to vector<2x128xf32>
    %cst_25 = arith.constant dense<0.000000e+00> : vector<2x128xf32>
    %130 = tpu.matmul %128, %7, %cst_25 {dimension_numbers = #tpu.dot_dimension_numbers<[1], [0], [0], [1], [0, 0, 1, 1], [], []>} : vector<2x32xf32>, vector<32x128xf32>, vector<2x128xf32> -> vector<2x128xf32>
    %131 = vector.extract_strided_slice %129 {offsets = [0, 0], sizes = [2, 64], strides = [1, 1]} : vector<2x128xf32> to vector<2x64xf32>
    %132 = vector.extract_strided_slice %130 {offsets = [0, 0], sizes = [2, 64], strides = [1, 1]} : vector<2x128xf32> to vector<2x64xf32>
    %133 = arith.addf %131, %132 : vector<2x64xf32>
    %134 = arith.negf %133 : vector<2x64xf32>
    %135 = math.exp %134 : vector<2x64xf32>
    %cst_26 = arith.constant 1.000000e+00 : f32
    %136 = vector.broadcast %cst_26 : f32 to vector<2x64xf32>
    %137 = arith.addf %136, %135 : vector<2x64xf32>
    %138 = arith.divf %136, %137 : vector<2x64xf32>
    %139 = vector.extract_strided_slice %138 {offsets = [0, 0], sizes = [2, 32], strides = [1, 1]} : vector<2x64xf32> to vector<2x32xf32>
    %140 = vector.extract_strided_slice %138 {offsets = [0, 32], sizes = [2, 32], strides = [1, 1]} : vector<2x64xf32> to vector<2x32xf32>
    %141 = vector.extract_strided_slice %129 {offsets = [0, 64], sizes = [2, 32], strides = [1, 1]} : vector<2x128xf32> to vector<2x32xf32>
    %142 = vector.extract_strided_slice %130 {offsets = [0, 64], sizes = [2, 32], strides = [1, 1]} : vector<2x128xf32> to vector<2x32xf32>
    %143 = vector.broadcast %8 : vector<1x32xf32> to vector<2x32xf32>
    %144 = arith.addf %142, %143 : vector<2x32xf32>
    %145 = arith.mulf %139, %144 : vector<2x32xf32>
    %146 = arith.addf %141, %145 : vector<2x32xf32>
    %147 = math.tanh %146 : vector<2x32xf32>
    %cst_27 = arith.constant 1.000000e+00 : f32
    %148 = vector.broadcast %cst_27 : f32 to vector<2x32xf32>
    %149 = arith.subf %148, %140 : vector<2x32xf32>
    %150 = arith.mulf %149, %147 : vector<2x32xf32>
    %151 = arith.mulf %140, %128 : vector<2x32xf32>
    %152 = arith.addf %150, %151 : vector<2x32xf32>
    %153 = vector.extract_strided_slice %5 {offsets = [12, 0], sizes = [2, 128], strides = [1, 1]} : vector<20x128xf32> to vector<2x128xf32>
    %cst_28 = arith.constant dense<0.000000e+00> : vector<2x128xf32>
    %154 = tpu.matmul %152, %7, %cst_28 {dimension_numbers = #tpu.dot_dimension_numbers<[1], [0], [0], [1], [0, 0, 1, 1], [], []>} : vector<2x32xf32>, vector<32x128xf32>, vector<2x128xf32> -> vector<2x128xf32>
    %155 = vector.extract_strided_slice %153 {offsets = [0, 0], sizes = [2, 64], strides = [1, 1]} : vector<2x128xf32> to vector<2x64xf32>
    %156 = vector.extract_strided_slice %154 {offsets = [0, 0], sizes = [2, 64], strides = [1, 1]} : vector<2x128xf32> to vector<2x64xf32>
    %157 = arith.addf %155, %156 : vector<2x64xf32>
    %158 = arith.negf %157 : vector<2x64xf32>
    %159 = math.exp %158 : vector<2x64xf32>
    %cst_29 = arith.constant 1.000000e+00 : f32
    %160 = vector.broadcast %cst_29 : f32 to vector<2x64xf32>
    %161 = arith.addf %160, %159 : vector<2x64xf32>
    %162 = arith.divf %160, %161 : vector<2x64xf32>
    %163 = vector.extract_strided_slice %162 {offsets = [0, 0], sizes = [2, 32], strides = [1, 1]} : vector<2x64xf32> to vector<2x32xf32>
    %164 = vector.extract_strided_slice %162 {offsets = [0, 32], sizes = [2, 32], strides = [1, 1]} : vector<2x64xf32> to vector<2x32xf32>
    %165 = vector.extract_strided_slice %153 {offsets = [0, 64], sizes = [2, 32], strides = [1, 1]} : vector<2x128xf32> to vector<2x32xf32>
    %166 = vector.extract_strided_slice %154 {offsets = [0, 64], sizes = [2, 32], strides = [1, 1]} : vector<2x128xf32> to vector<2x32xf32>
    %167 = vector.broadcast %8 : vector<1x32xf32> to vector<2x32xf32>
    %168 = arith.addf %166, %167 : vector<2x32xf32>
    %169 = arith.mulf %163, %168 : vector<2x32xf32>
    %170 = arith.addf %165, %169 : vector<2x32xf32>
    %171 = math.tanh %170 : vector<2x32xf32>
    %cst_30 = arith.constant 1.000000e+00 : f32
    %172 = vector.broadcast %cst_30 : f32 to vector<2x32xf32>
    %173 = arith.subf %172, %164 : vector<2x32xf32>
    %174 = arith.mulf %173, %171 : vector<2x32xf32>
    %175 = arith.mulf %164, %152 : vector<2x32xf32>
    %176 = arith.addf %174, %175 : vector<2x32xf32>
    %177 = vector.extract_strided_slice %5 {offsets = [14, 0], sizes = [2, 128], strides = [1, 1]} : vector<20x128xf32> to vector<2x128xf32>
    %cst_31 = arith.constant dense<0.000000e+00> : vector<2x128xf32>
    %178 = tpu.matmul %176, %7, %cst_31 {dimension_numbers = #tpu.dot_dimension_numbers<[1], [0], [0], [1], [0, 0, 1, 1], [], []>} : vector<2x32xf32>, vector<32x128xf32>, vector<2x128xf32> -> vector<2x128xf32>
    %179 = vector.extract_strided_slice %177 {offsets = [0, 0], sizes = [2, 64], strides = [1, 1]} : vector<2x128xf32> to vector<2x64xf32>
    %180 = vector.extract_strided_slice %178 {offsets = [0, 0], sizes = [2, 64], strides = [1, 1]} : vector<2x128xf32> to vector<2x64xf32>
    %181 = arith.addf %179, %180 : vector<2x64xf32>
    %182 = arith.negf %181 : vector<2x64xf32>
    %183 = math.exp %182 : vector<2x64xf32>
    %cst_32 = arith.constant 1.000000e+00 : f32
    %184 = vector.broadcast %cst_32 : f32 to vector<2x64xf32>
    %185 = arith.addf %184, %183 : vector<2x64xf32>
    %186 = arith.divf %184, %185 : vector<2x64xf32>
    %187 = vector.extract_strided_slice %186 {offsets = [0, 0], sizes = [2, 32], strides = [1, 1]} : vector<2x64xf32> to vector<2x32xf32>
    %188 = vector.extract_strided_slice %186 {offsets = [0, 32], sizes = [2, 32], strides = [1, 1]} : vector<2x64xf32> to vector<2x32xf32>
    %189 = vector.extract_strided_slice %177 {offsets = [0, 64], sizes = [2, 32], strides = [1, 1]} : vector<2x128xf32> to vector<2x32xf32>
    %190 = vector.extract_strided_slice %178 {offsets = [0, 64], sizes = [2, 32], strides = [1, 1]} : vector<2x128xf32> to vector<2x32xf32>
    %191 = vector.broadcast %8 : vector<1x32xf32> to vector<2x32xf32>
    %192 = arith.addf %190, %191 : vector<2x32xf32>
    %193 = arith.mulf %187, %192 : vector<2x32xf32>
    %194 = arith.addf %189, %193 : vector<2x32xf32>
    %195 = math.tanh %194 : vector<2x32xf32>
    %cst_33 = arith.constant 1.000000e+00 : f32
    %196 = vector.broadcast %cst_33 : f32 to vector<2x32xf32>
    %197 = arith.subf %196, %188 : vector<2x32xf32>
    %198 = arith.mulf %197, %195 : vector<2x32xf32>
    %199 = arith.mulf %188, %176 : vector<2x32xf32>
    %200 = arith.addf %198, %199 : vector<2x32xf32>
    %201 = vector.extract_strided_slice %5 {offsets = [16, 0], sizes = [2, 128], strides = [1, 1]} : vector<20x128xf32> to vector<2x128xf32>
    %cst_34 = arith.constant dense<0.000000e+00> : vector<2x128xf32>
    %202 = tpu.matmul %200, %7, %cst_34 {dimension_numbers = #tpu.dot_dimension_numbers<[1], [0], [0], [1], [0, 0, 1, 1], [], []>} : vector<2x32xf32>, vector<32x128xf32>, vector<2x128xf32> -> vector<2x128xf32>
    %203 = vector.extract_strided_slice %201 {offsets = [0, 0], sizes = [2, 64], strides = [1, 1]} : vector<2x128xf32> to vector<2x64xf32>
    %204 = vector.extract_strided_slice %202 {offsets = [0, 0], sizes = [2, 64], strides = [1, 1]} : vector<2x128xf32> to vector<2x64xf32>
    %205 = arith.addf %203, %204 : vector<2x64xf32>
    %206 = arith.negf %205 : vector<2x64xf32>
    %207 = math.exp %206 : vector<2x64xf32>
    %cst_35 = arith.constant 1.000000e+00 : f32
    %208 = vector.broadcast %cst_35 : f32 to vector<2x64xf32>
    %209 = arith.addf %208, %207 : vector<2x64xf32>
    %210 = arith.divf %208, %209 : vector<2x64xf32>
    %211 = vector.extract_strided_slice %210 {offsets = [0, 0], sizes = [2, 32], strides = [1, 1]} : vector<2x64xf32> to vector<2x32xf32>
    %212 = vector.extract_strided_slice %210 {offsets = [0, 32], sizes = [2, 32], strides = [1, 1]} : vector<2x64xf32> to vector<2x32xf32>
    %213 = vector.extract_strided_slice %201 {offsets = [0, 64], sizes = [2, 32], strides = [1, 1]} : vector<2x128xf32> to vector<2x32xf32>
    %214 = vector.extract_strided_slice %202 {offsets = [0, 64], sizes = [2, 32], strides = [1, 1]} : vector<2x128xf32> to vector<2x32xf32>
    %215 = vector.broadcast %8 : vector<1x32xf32> to vector<2x32xf32>
    %216 = arith.addf %214, %215 : vector<2x32xf32>
    %217 = arith.mulf %211, %216 : vector<2x32xf32>
    %218 = arith.addf %213, %217 : vector<2x32xf32>
    %219 = math.tanh %218 : vector<2x32xf32>
    %cst_36 = arith.constant 1.000000e+00 : f32
    %220 = vector.broadcast %cst_36 : f32 to vector<2x32xf32>
    %221 = arith.subf %220, %212 : vector<2x32xf32>
    %222 = arith.mulf %221, %219 : vector<2x32xf32>
    %223 = arith.mulf %212, %200 : vector<2x32xf32>
    %224 = arith.addf %222, %223 : vector<2x32xf32>
    %225 = vector.extract_strided_slice %5 {offsets = [18, 0], sizes = [2, 128], strides = [1, 1]} : vector<20x128xf32> to vector<2x128xf32>
    %cst_37 = arith.constant dense<0.000000e+00> : vector<2x128xf32>
    %226 = tpu.matmul %224, %7, %cst_37 {dimension_numbers = #tpu.dot_dimension_numbers<[1], [0], [0], [1], [0, 0, 1, 1], [], []>} : vector<2x32xf32>, vector<32x128xf32>, vector<2x128xf32> -> vector<2x128xf32>
    %227 = vector.extract_strided_slice %225 {offsets = [0, 0], sizes = [2, 64], strides = [1, 1]} : vector<2x128xf32> to vector<2x64xf32>
    %228 = vector.extract_strided_slice %226 {offsets = [0, 0], sizes = [2, 64], strides = [1, 1]} : vector<2x128xf32> to vector<2x64xf32>
    %229 = arith.addf %227, %228 : vector<2x64xf32>
    %230 = arith.negf %229 : vector<2x64xf32>
    %231 = math.exp %230 : vector<2x64xf32>
    %cst_38 = arith.constant 1.000000e+00 : f32
    %232 = vector.broadcast %cst_38 : f32 to vector<2x64xf32>
    %233 = arith.addf %232, %231 : vector<2x64xf32>
    %234 = arith.divf %232, %233 : vector<2x64xf32>
    %235 = vector.extract_strided_slice %234 {offsets = [0, 0], sizes = [2, 32], strides = [1, 1]} : vector<2x64xf32> to vector<2x32xf32>
    %236 = vector.extract_strided_slice %234 {offsets = [0, 32], sizes = [2, 32], strides = [1, 1]} : vector<2x64xf32> to vector<2x32xf32>
    %237 = vector.extract_strided_slice %225 {offsets = [0, 64], sizes = [2, 32], strides = [1, 1]} : vector<2x128xf32> to vector<2x32xf32>
    %238 = vector.extract_strided_slice %226 {offsets = [0, 64], sizes = [2, 32], strides = [1, 1]} : vector<2x128xf32> to vector<2x32xf32>
    %239 = vector.broadcast %8 : vector<1x32xf32> to vector<2x32xf32>
    %240 = arith.addf %238, %239 : vector<2x32xf32>
    %241 = arith.mulf %235, %240 : vector<2x32xf32>
    %242 = arith.addf %237, %241 : vector<2x32xf32>
    %243 = math.tanh %242 : vector<2x32xf32>
    %cst_39 = arith.constant 1.000000e+00 : f32
    %244 = vector.broadcast %cst_39 : f32 to vector<2x32xf32>
    %245 = arith.subf %244, %236 : vector<2x32xf32>
    %246 = arith.mulf %245, %243 : vector<2x32xf32>
    %247 = arith.mulf %236, %224 : vector<2x32xf32>
    %248 = arith.addf %246, %247 : vector<2x32xf32>
    %c0_40 = arith.constant 0 : index
    %c0_41 = arith.constant 0 : index
    %249 = vector.load %arg1[%c0_40, %c0_41] : memref<16x32xf32, #tpu.memory_space<vmem>>, vector<16x32xf32>
    %c0_42 = arith.constant 0 : index
    %c0_43 = arith.constant 0 : index
    %250 = vector.load %arg6[%c0_42, %c0_43] : memref<32x128xf32, #tpu.memory_space<vmem>>, vector<32x128xf32>
    %cst_44 = arith.constant dense<0.000000e+00> : vector<16x128xf32>
    %251 = tpu.matmul %249, %250, %cst_44 {dimension_numbers = #tpu.dot_dimension_numbers<[1], [0], [0], [1], [0, 0, 1, 1], [], []>} : vector<16x32xf32>, vector<32x128xf32>, vector<16x128xf32> -> vector<16x128xf32>
    %c0_45 = arith.constant 0 : index
    %c0_46 = arith.constant 0 : index
    %252 = vector.load %arg8[%c0_45, %c0_46] : memref<1x128xf32, #tpu.memory_space<vmem>>, vector<1x128xf32>
    %253 = vector.broadcast %252 : vector<1x128xf32> to vector<16x128xf32>
    %254 = arith.addf %251, %253 : vector<16x128xf32>
    %c0_47 = arith.constant 0 : index
    %c0_48 = arith.constant 0 : index
    %255 = vector.load %arg7[%c0_47, %c0_48] : memref<32x128xf32, #tpu.memory_space<vmem>>, vector<32x128xf32>
    %c0_49 = arith.constant 0 : index
    %c0_50 = arith.constant 0 : index
    %256 = vector.load %arg9[%c0_49, %c0_50] : memref<1x32xf32, #tpu.memory_space<vmem>>, vector<1x32xf32>
    %257 = vector.extract_strided_slice %254 {offsets = [0, 0], sizes = [2, 128], strides = [1, 1]} : vector<16x128xf32> to vector<2x128xf32>
    %cst_51 = arith.constant dense<0.000000e+00> : vector<2x128xf32>
    %258 = tpu.matmul %248, %255, %cst_51 {dimension_numbers = #tpu.dot_dimension_numbers<[1], [0], [0], [1], [0, 0, 1, 1], [], []>} : vector<2x32xf32>, vector<32x128xf32>, vector<2x128xf32> -> vector<2x128xf32>
    %259 = vector.extract_strided_slice %257 {offsets = [0, 0], sizes = [2, 64], strides = [1, 1]} : vector<2x128xf32> to vector<2x64xf32>
    %260 = vector.extract_strided_slice %258 {offsets = [0, 0], sizes = [2, 64], strides = [1, 1]} : vector<2x128xf32> to vector<2x64xf32>
    %261 = arith.addf %259, %260 : vector<2x64xf32>
    %262 = arith.negf %261 : vector<2x64xf32>
    %263 = math.exp %262 : vector<2x64xf32>
    %cst_52 = arith.constant 1.000000e+00 : f32
    %264 = vector.broadcast %cst_52 : f32 to vector<2x64xf32>
    %265 = arith.addf %264, %263 : vector<2x64xf32>
    %266 = arith.divf %264, %265 : vector<2x64xf32>
    %267 = vector.extract_strided_slice %266 {offsets = [0, 0], sizes = [2, 32], strides = [1, 1]} : vector<2x64xf32> to vector<2x32xf32>
    %268 = vector.extract_strided_slice %266 {offsets = [0, 32], sizes = [2, 32], strides = [1, 1]} : vector<2x64xf32> to vector<2x32xf32>
    %269 = vector.extract_strided_slice %257 {offsets = [0, 64], sizes = [2, 32], strides = [1, 1]} : vector<2x128xf32> to vector<2x32xf32>
    %270 = vector.extract_strided_slice %258 {offsets = [0, 64], sizes = [2, 32], strides = [1, 1]} : vector<2x128xf32> to vector<2x32xf32>
    %271 = vector.broadcast %256 : vector<1x32xf32> to vector<2x32xf32>
    %272 = arith.addf %270, %271 : vector<2x32xf32>
    %273 = arith.mulf %267, %272 : vector<2x32xf32>
    %274 = arith.addf %269, %273 : vector<2x32xf32>
    %275 = math.tanh %274 : vector<2x32xf32>
    %cst_53 = arith.constant 1.000000e+00 : f32
    %276 = vector.broadcast %cst_53 : f32 to vector<2x32xf32>
    %277 = arith.subf %276, %268 : vector<2x32xf32>
    %278 = arith.mulf %277, %275 : vector<2x32xf32>
    %279 = arith.mulf %268, %248 : vector<2x32xf32>
    %280 = arith.addf %278, %279 : vector<2x32xf32>
    %c0_54 = arith.constant 0 : index
    %c0_55 = arith.constant 0 : index
    %281 = vector.load %arg13[%c0_54, %c0_55] : memref<16x32xf32, #tpu.memory_space<vmem>>, vector<2x32xf32>
    tpu.vector_store %arg13[%c0_54, %c0_55], %280 {strides = array<i32>} : memref<16x32xf32, #tpu.memory_space<vmem>>, vector<2x32xf32>,
    %282 = vector.extract_strided_slice %254 {offsets = [2, 0], sizes = [2, 128], strides = [1, 1]} : vector<16x128xf32> to vector<2x128xf32>
    %cst_56 = arith.constant dense<0.000000e+00> : vector<2x128xf32>
    %283 = tpu.matmul %280, %255, %cst_56 {dimension_numbers = #tpu.dot_dimension_numbers<[1], [0], [0], [1], [0, 0, 1, 1], [], []>} : vector<2x32xf32>, vector<32x128xf32>, vector<2x128xf32> -> vector<2x128xf32>
    %284 = vector.extract_strided_slice %282 {offsets = [0, 0], sizes = [2, 64], strides = [1, 1]} : vector<2x128xf32> to vector<2x64xf32>
    %285 = vector.extract_strided_slice %283 {offsets = [0, 0], sizes = [2, 64], strides = [1, 1]} : vector<2x128xf32> to vector<2x64xf32>
    %286 = arith.addf %284, %285 : vector<2x64xf32>
    %287 = arith.negf %286 : vector<2x64xf32>
    %288 = math.exp %287 : vector<2x64xf32>
    %cst_57 = arith.constant 1.000000e+00 : f32
    %289 = vector.broadcast %cst_57 : f32 to vector<2x64xf32>
    %290 = arith.addf %289, %288 : vector<2x64xf32>
    %291 = arith.divf %289, %290 : vector<2x64xf32>
    %292 = vector.extract_strided_slice %291 {offsets = [0, 0], sizes = [2, 32], strides = [1, 1]} : vector<2x64xf32> to vector<2x32xf32>
    %293 = vector.extract_strided_slice %291 {offsets = [0, 32], sizes = [2, 32], strides = [1, 1]} : vector<2x64xf32> to vector<2x32xf32>
    %294 = vector.extract_strided_slice %282 {offsets = [0, 64], sizes = [2, 32], strides = [1, 1]} : vector<2x128xf32> to vector<2x32xf32>
    %295 = vector.extract_strided_slice %283 {offsets = [0, 64], sizes = [2, 32], strides = [1, 1]} : vector<2x128xf32> to vector<2x32xf32>
    %296 = vector.broadcast %256 : vector<1x32xf32> to vector<2x32xf32>
    %297 = arith.addf %295, %296 : vector<2x32xf32>
    %298 = arith.mulf %292, %297 : vector<2x32xf32>
    %299 = arith.addf %294, %298 : vector<2x32xf32>
    %300 = math.tanh %299 : vector<2x32xf32>
    %cst_58 = arith.constant 1.000000e+00 : f32
    %301 = vector.broadcast %cst_58 : f32 to vector<2x32xf32>
    %302 = arith.subf %301, %293 : vector<2x32xf32>
    %303 = arith.mulf %302, %300 : vector<2x32xf32>
    %304 = arith.mulf %293, %280 : vector<2x32xf32>
    %305 = arith.addf %303, %304 : vector<2x32xf32>
    %c2 = arith.constant 2 : index
    %c0_59 = arith.constant 0 : index
    %306 = vector.load %arg13[%c2, %c0_59] : memref<16x32xf32, #tpu.memory_space<vmem>>, vector<2x32xf32>
    tpu.vector_store %arg13[%c2, %c0_59], %305 {strides = array<i32>} : memref<16x32xf32, #tpu.memory_space<vmem>>, vector<2x32xf32>,
    %307 = vector.extract_strided_slice %254 {offsets = [4, 0], sizes = [2, 128], strides = [1, 1]} : vector<16x128xf32> to vector<2x128xf32>
    %cst_60 = arith.constant dense<0.000000e+00> : vector<2x128xf32>
    %308 = tpu.matmul %305, %255, %cst_60 {dimension_numbers = #tpu.dot_dimension_numbers<[1], [0], [0], [1], [0, 0, 1, 1], [], []>} : vector<2x32xf32>, vector<32x128xf32>, vector<2x128xf32> -> vector<2x128xf32>
    %309 = vector.extract_strided_slice %307 {offsets = [0, 0], sizes = [2, 64], strides = [1, 1]} : vector<2x128xf32> to vector<2x64xf32>
    %310 = vector.extract_strided_slice %308 {offsets = [0, 0], sizes = [2, 64], strides = [1, 1]} : vector<2x128xf32> to vector<2x64xf32>
    %311 = arith.addf %309, %310 : vector<2x64xf32>
    %312 = arith.negf %311 : vector<2x64xf32>
    %313 = math.exp %312 : vector<2x64xf32>
    %cst_61 = arith.constant 1.000000e+00 : f32
    %314 = vector.broadcast %cst_61 : f32 to vector<2x64xf32>
    %315 = arith.addf %314, %313 : vector<2x64xf32>
    %316 = arith.divf %314, %315 : vector<2x64xf32>
    %317 = vector.extract_strided_slice %316 {offsets = [0, 0], sizes = [2, 32], strides = [1, 1]} : vector<2x64xf32> to vector<2x32xf32>
    %318 = vector.extract_strided_slice %316 {offsets = [0, 32], sizes = [2, 32], strides = [1, 1]} : vector<2x64xf32> to vector<2x32xf32>
    %319 = vector.extract_strided_slice %307 {offsets = [0, 64], sizes = [2, 32], strides = [1, 1]} : vector<2x128xf32> to vector<2x32xf32>
    %320 = vector.extract_strided_slice %308 {offsets = [0, 64], sizes = [2, 32], strides = [1, 1]} : vector<2x128xf32> to vector<2x32xf32>
    %321 = vector.broadcast %256 : vector<1x32xf32> to vector<2x32xf32>
    %322 = arith.addf %320, %321 : vector<2x32xf32>
    %323 = arith.mulf %317, %322 : vector<2x32xf32>
    %324 = arith.addf %319, %323 : vector<2x32xf32>
    %325 = math.tanh %324 : vector<2x32xf32>
    %cst_62 = arith.constant 1.000000e+00 : f32
    %326 = vector.broadcast %cst_62 : f32 to vector<2x32xf32>
    %327 = arith.subf %326, %318 : vector<2x32xf32>
    %328 = arith.mulf %327, %325 : vector<2x32xf32>
    %329 = arith.mulf %318, %305 : vector<2x32xf32>
    %330 = arith.addf %328, %329 : vector<2x32xf32>
    %c4 = arith.constant 4 : index
    %c0_63 = arith.constant 0 : index
    %331 = vector.load %arg13[%c4, %c0_63] : memref<16x32xf32, #tpu.memory_space<vmem>>, vector<2x32xf32>
    tpu.vector_store %arg13[%c4, %c0_63], %330 {strides = array<i32>} : memref<16x32xf32, #tpu.memory_space<vmem>>, vector<2x32xf32>,
    %332 = vector.extract_strided_slice %254 {offsets = [6, 0], sizes = [2, 128], strides = [1, 1]} : vector<16x128xf32> to vector<2x128xf32>
    %cst_64 = arith.constant dense<0.000000e+00> : vector<2x128xf32>
    %333 = tpu.matmul %330, %255, %cst_64 {dimension_numbers = #tpu.dot_dimension_numbers<[1], [0], [0], [1], [0, 0, 1, 1], [], []>} : vector<2x32xf32>, vector<32x128xf32>, vector<2x128xf32> -> vector<2x128xf32>
    %334 = vector.extract_strided_slice %332 {offsets = [0, 0], sizes = [2, 64], strides = [1, 1]} : vector<2x128xf32> to vector<2x64xf32>
    %335 = vector.extract_strided_slice %333 {offsets = [0, 0], sizes = [2, 64], strides = [1, 1]} : vector<2x128xf32> to vector<2x64xf32>
    %336 = arith.addf %334, %335 : vector<2x64xf32>
    %337 = arith.negf %336 : vector<2x64xf32>
    %338 = math.exp %337 : vector<2x64xf32>
    %cst_65 = arith.constant 1.000000e+00 : f32
    %339 = vector.broadcast %cst_65 : f32 to vector<2x64xf32>
    %340 = arith.addf %339, %338 : vector<2x64xf32>
    %341 = arith.divf %339, %340 : vector<2x64xf32>
    %342 = vector.extract_strided_slice %341 {offsets = [0, 0], sizes = [2, 32], strides = [1, 1]} : vector<2x64xf32> to vector<2x32xf32>
    %343 = vector.extract_strided_slice %341 {offsets = [0, 32], sizes = [2, 32], strides = [1, 1]} : vector<2x64xf32> to vector<2x32xf32>
    %344 = vector.extract_strided_slice %332 {offsets = [0, 64], sizes = [2, 32], strides = [1, 1]} : vector<2x128xf32> to vector<2x32xf32>
    %345 = vector.extract_strided_slice %333 {offsets = [0, 64], sizes = [2, 32], strides = [1, 1]} : vector<2x128xf32> to vector<2x32xf32>
    %346 = vector.broadcast %256 : vector<1x32xf32> to vector<2x32xf32>
    %347 = arith.addf %345, %346 : vector<2x32xf32>
    %348 = arith.mulf %342, %347 : vector<2x32xf32>
    %349 = arith.addf %344, %348 : vector<2x32xf32>
    %350 = math.tanh %349 : vector<2x32xf32>
    %cst_66 = arith.constant 1.000000e+00 : f32
    %351 = vector.broadcast %cst_66 : f32 to vector<2x32xf32>
    %352 = arith.subf %351, %343 : vector<2x32xf32>
    %353 = arith.mulf %352, %350 : vector<2x32xf32>
    %354 = arith.mulf %343, %330 : vector<2x32xf32>
    %355 = arith.addf %353, %354 : vector<2x32xf32>
    %c6 = arith.constant 6 : index
    %c0_67 = arith.constant 0 : index
    %356 = vector.load %arg13[%c6, %c0_67] : memref<16x32xf32, #tpu.memory_space<vmem>>, vector<2x32xf32>
    tpu.vector_store %arg13[%c6, %c0_67], %355 {strides = array<i32>} : memref<16x32xf32, #tpu.memory_space<vmem>>, vector<2x32xf32>,
    %357 = vector.extract_strided_slice %254 {offsets = [8, 0], sizes = [2, 128], strides = [1, 1]} : vector<16x128xf32> to vector<2x128xf32>
    %cst_68 = arith.constant dense<0.000000e+00> : vector<2x128xf32>
    %358 = tpu.matmul %355, %255, %cst_68 {dimension_numbers = #tpu.dot_dimension_numbers<[1], [0], [0], [1], [0, 0, 1, 1], [], []>} : vector<2x32xf32>, vector<32x128xf32>, vector<2x128xf32> -> vector<2x128xf32>
    %359 = vector.extract_strided_slice %357 {offsets = [0, 0], sizes = [2, 64], strides = [1, 1]} : vector<2x128xf32> to vector<2x64xf32>
    %360 = vector.extract_strided_slice %358 {offsets = [0, 0], sizes = [2, 64], strides = [1, 1]} : vector<2x128xf32> to vector<2x64xf32>
    %361 = arith.addf %359, %360 : vector<2x64xf32>
    %362 = arith.negf %361 : vector<2x64xf32>
    %363 = math.exp %362 : vector<2x64xf32>
    %cst_69 = arith.constant 1.000000e+00 : f32
    %364 = vector.broadcast %cst_69 : f32 to vector<2x64xf32>
    %365 = arith.addf %364, %363 : vector<2x64xf32>
    %366 = arith.divf %364, %365 : vector<2x64xf32>
    %367 = vector.extract_strided_slice %366 {offsets = [0, 0], sizes = [2, 32], strides = [1, 1]} : vector<2x64xf32> to vector<2x32xf32>
    %368 = vector.extract_strided_slice %366 {offsets = [0, 32], sizes = [2, 32], strides = [1, 1]} : vector<2x64xf32> to vector<2x32xf32>
    %369 = vector.extract_strided_slice %357 {offsets = [0, 64], sizes = [2, 32], strides = [1, 1]} : vector<2x128xf32> to vector<2x32xf32>
    %370 = vector.extract_strided_slice %358 {offsets = [0, 64], sizes = [2, 32], strides = [1, 1]} : vector<2x128xf32> to vector<2x32xf32>
    %371 = vector.broadcast %256 : vector<1x32xf32> to vector<2x32xf32>
    %372 = arith.addf %370, %371 : vector<2x32xf32>
    %373 = arith.mulf %367, %372 : vector<2x32xf32>
    %374 = arith.addf %369, %373 : vector<2x32xf32>
    %375 = math.tanh %374 : vector<2x32xf32>
    %cst_70 = arith.constant 1.000000e+00 : f32
    %376 = vector.broadcast %cst_70 : f32 to vector<2x32xf32>
    %377 = arith.subf %376, %368 : vector<2x32xf32>
    %378 = arith.mulf %377, %375 : vector<2x32xf32>
    %379 = arith.mulf %368, %355 : vector<2x32xf32>
    %380 = arith.addf %378, %379 : vector<2x32xf32>
    %c8 = arith.constant 8 : index
    %c0_71 = arith.constant 0 : index
    %381 = vector.load %arg13[%c8, %c0_71] : memref<16x32xf32, #tpu.memory_space<vmem>>, vector<2x32xf32>
    tpu.vector_store %arg13[%c8, %c0_71], %380 {strides = array<i32>} : memref<16x32xf32, #tpu.memory_space<vmem>>, vector<2x32xf32>,
    %382 = vector.extract_strided_slice %254 {offsets = [10, 0], sizes = [2, 128], strides = [1, 1]} : vector<16x128xf32> to vector<2x128xf32>
    %cst_72 = arith.constant dense<0.000000e+00> : vector<2x128xf32>
    %383 = tpu.matmul %380, %255, %cst_72 {dimension_numbers = #tpu.dot_dimension_numbers<[1], [0], [0], [1], [0, 0, 1, 1], [], []>} : vector<2x32xf32>, vector<32x128xf32>, vector<2x128xf32> -> vector<2x128xf32>
    %384 = vector.extract_strided_slice %382 {offsets = [0, 0], sizes = [2, 64], strides = [1, 1]} : vector<2x128xf32> to vector<2x64xf32>
    %385 = vector.extract_strided_slice %383 {offsets = [0, 0], sizes = [2, 64], strides = [1, 1]} : vector<2x128xf32> to vector<2x64xf32>
    %386 = arith.addf %384, %385 : vector<2x64xf32>
    %387 = arith.negf %386 : vector<2x64xf32>
    %388 = math.exp %387 : vector<2x64xf32>
    %cst_73 = arith.constant 1.000000e+00 : f32
    %389 = vector.broadcast %cst_73 : f32 to vector<2x64xf32>
    %390 = arith.addf %389, %388 : vector<2x64xf32>
    %391 = arith.divf %389, %390 : vector<2x64xf32>
    %392 = vector.extract_strided_slice %391 {offsets = [0, 0], sizes = [2, 32], strides = [1, 1]} : vector<2x64xf32> to vector<2x32xf32>
    %393 = vector.extract_strided_slice %391 {offsets = [0, 32], sizes = [2, 32], strides = [1, 1]} : vector<2x64xf32> to vector<2x32xf32>
    %394 = vector.extract_strided_slice %382 {offsets = [0, 64], sizes = [2, 32], strides = [1, 1]} : vector<2x128xf32> to vector<2x32xf32>
    %395 = vector.extract_strided_slice %383 {offsets = [0, 64], sizes = [2, 32], strides = [1, 1]} : vector<2x128xf32> to vector<2x32xf32>
    %396 = vector.broadcast %256 : vector<1x32xf32> to vector<2x32xf32>
    %397 = arith.addf %395, %396 : vector<2x32xf32>
    %398 = arith.mulf %392, %397 : vector<2x32xf32>
    %399 = arith.addf %394, %398 : vector<2x32xf32>
    %400 = math.tanh %399 : vector<2x32xf32>
    %cst_74 = arith.constant 1.000000e+00 : f32
    %401 = vector.broadcast %cst_74 : f32 to vector<2x32xf32>
    %402 = arith.subf %401, %393 : vector<2x32xf32>
    %403 = arith.mulf %402, %400 : vector<2x32xf32>
    %404 = arith.mulf %393, %380 : vector<2x32xf32>
    %405 = arith.addf %403, %404 : vector<2x32xf32>
    %c10 = arith.constant 10 : index
    %c0_75 = arith.constant 0 : index
    %406 = vector.load %arg13[%c10, %c0_75] : memref<16x32xf32, #tpu.memory_space<vmem>>, vector<2x32xf32>
    tpu.vector_store %arg13[%c10, %c0_75], %405 {strides = array<i32>} : memref<16x32xf32, #tpu.memory_space<vmem>>, vector<2x32xf32>,
    %407 = vector.extract_strided_slice %254 {offsets = [12, 0], sizes = [2, 128], strides = [1, 1]} : vector<16x128xf32> to vector<2x128xf32>
    %cst_76 = arith.constant dense<0.000000e+00> : vector<2x128xf32>
    %408 = tpu.matmul %405, %255, %cst_76 {dimension_numbers = #tpu.dot_dimension_numbers<[1], [0], [0], [1], [0, 0, 1, 1], [], []>} : vector<2x32xf32>, vector<32x128xf32>, vector<2x128xf32> -> vector<2x128xf32>
    %409 = vector.extract_strided_slice %407 {offsets = [0, 0], sizes = [2, 64], strides = [1, 1]} : vector<2x128xf32> to vector<2x64xf32>
    %410 = vector.extract_strided_slice %408 {offsets = [0, 0], sizes = [2, 64], strides = [1, 1]} : vector<2x128xf32> to vector<2x64xf32>
    %411 = arith.addf %409, %410 : vector<2x64xf32>
    %412 = arith.negf %411 : vector<2x64xf32>
    %413 = math.exp %412 : vector<2x64xf32>
    %cst_77 = arith.constant 1.000000e+00 : f32
    %414 = vector.broadcast %cst_77 : f32 to vector<2x64xf32>
    %415 = arith.addf %414, %413 : vector<2x64xf32>
    %416 = arith.divf %414, %415 : vector<2x64xf32>
    %417 = vector.extract_strided_slice %416 {offsets = [0, 0], sizes = [2, 32], strides = [1, 1]} : vector<2x64xf32> to vector<2x32xf32>
    %418 = vector.extract_strided_slice %416 {offsets = [0, 32], sizes = [2, 32], strides = [1, 1]} : vector<2x64xf32> to vector<2x32xf32>
    %419 = vector.extract_strided_slice %407 {offsets = [0, 64], sizes = [2, 32], strides = [1, 1]} : vector<2x128xf32> to vector<2x32xf32>
    %420 = vector.extract_strided_slice %408 {offsets = [0, 64], sizes = [2, 32], strides = [1, 1]} : vector<2x128xf32> to vector<2x32xf32>
    %421 = vector.broadcast %256 : vector<1x32xf32> to vector<2x32xf32>
    %422 = arith.addf %420, %421 : vector<2x32xf32>
    %423 = arith.mulf %417, %422 : vector<2x32xf32>
    %424 = arith.addf %419, %423 : vector<2x32xf32>
    %425 = math.tanh %424 : vector<2x32xf32>
    %cst_78 = arith.constant 1.000000e+00 : f32
    %426 = vector.broadcast %cst_78 : f32 to vector<2x32xf32>
    %427 = arith.subf %426, %418 : vector<2x32xf32>
    %428 = arith.mulf %427, %425 : vector<2x32xf32>
    %429 = arith.mulf %418, %405 : vector<2x32xf32>
    %430 = arith.addf %428, %429 : vector<2x32xf32>
    %c12 = arith.constant 12 : index
    %c0_79 = arith.constant 0 : index
    %431 = vector.load %arg13[%c12, %c0_79] : memref<16x32xf32, #tpu.memory_space<vmem>>, vector<2x32xf32>
    tpu.vector_store %arg13[%c12, %c0_79], %430 {strides = array<i32>} : memref<16x32xf32, #tpu.memory_space<vmem>>, vector<2x32xf32>,
    %432 = vector.extract_strided_slice %254 {offsets = [14, 0], sizes = [2, 128], strides = [1, 1]} : vector<16x128xf32> to vector<2x128xf32>
    %cst_80 = arith.constant dense<0.000000e+00> : vector<2x128xf32>
    %433 = tpu.matmul %430, %255, %cst_80 {dimension_numbers = #tpu.dot_dimension_numbers<[1], [0], [0], [1], [0, 0, 1, 1], [], []>} : vector<2x32xf32>, vector<32x128xf32>, vector<2x128xf32> -> vector<2x128xf32>
    %434 = vector.extract_strided_slice %432 {offsets = [0, 0], sizes = [2, 64], strides = [1, 1]} : vector<2x128xf32> to vector<2x64xf32>
    %435 = vector.extract_strided_slice %433 {offsets = [0, 0], sizes = [2, 64], strides = [1, 1]} : vector<2x128xf32> to vector<2x64xf32>
    %436 = arith.addf %434, %435 : vector<2x64xf32>
    %437 = arith.negf %436 : vector<2x64xf32>
    %438 = math.exp %437 : vector<2x64xf32>
    %cst_81 = arith.constant 1.000000e+00 : f32
    %439 = vector.broadcast %cst_81 : f32 to vector<2x64xf32>
    %440 = arith.addf %439, %438 : vector<2x64xf32>
    %441 = arith.divf %439, %440 : vector<2x64xf32>
    %442 = vector.extract_strided_slice %441 {offsets = [0, 0], sizes = [2, 32], strides = [1, 1]} : vector<2x64xf32> to vector<2x32xf32>
    %443 = vector.extract_strided_slice %441 {offsets = [0, 32], sizes = [2, 32], strides = [1, 1]} : vector<2x64xf32> to vector<2x32xf32>
    %444 = vector.extract_strided_slice %432 {offsets = [0, 64], sizes = [2, 32], strides = [1, 1]} : vector<2x128xf32> to vector<2x32xf32>
    %445 = vector.extract_strided_slice %433 {offsets = [0, 64], sizes = [2, 32], strides = [1, 1]} : vector<2x128xf32> to vector<2x32xf32>
    %446 = vector.broadcast %256 : vector<1x32xf32> to vector<2x32xf32>
    %447 = arith.addf %445, %446 : vector<2x32xf32>
    %448 = arith.mulf %442, %447 : vector<2x32xf32>
    %449 = arith.addf %444, %448 : vector<2x32xf32>
    %450 = math.tanh %449 : vector<2x32xf32>
    %cst_82 = arith.constant 1.000000e+00 : f32
    %451 = vector.broadcast %cst_82 : f32 to vector<2x32xf32>
    %452 = arith.subf %451, %443 : vector<2x32xf32>
    %453 = arith.mulf %452, %450 : vector<2x32xf32>
    %454 = arith.mulf %443, %430 : vector<2x32xf32>
    %455 = arith.addf %453, %454 : vector<2x32xf32>
    %c14 = arith.constant 14 : index
    %c0_83 = arith.constant 0 : index
    %456 = vector.load %arg13[%c14, %c0_83] : memref<16x32xf32, #tpu.memory_space<vmem>>, vector<2x32xf32>
    tpu.vector_store %arg13[%c14, %c0_83], %455 {strides = array<i32>} : memref<16x32xf32, #tpu.memory_space<vmem>>, vector<2x32xf32>,
    %c0_84 = arith.constant 0 : index
    %c0_85 = arith.constant 0 : index
    %457 = vector.load %arg13[%c0_84, %c0_85] : memref<16x32xf32, #tpu.memory_space<vmem>>, vector<16x32xf32>
    %c0_86 = arith.constant 0 : index
    %c0_87 = arith.constant 0 : index
    %458 = vector.load %arg10[%c0_86, %c0_87] : memref<32x128xf32, #tpu.memory_space<vmem>>, vector<32x128xf32>
    %cst_88 = arith.constant dense<0.000000e+00> : vector<16x128xf32>
    %459 = tpu.matmul %457, %458, %cst_88 {dimension_numbers = #tpu.dot_dimension_numbers<[1], [0], [0], [1], [0, 0, 1, 1], [], []>} : vector<16x32xf32>, vector<32x128xf32>, vector<16x128xf32> -> vector<16x128xf32>
    %c0_89 = arith.constant 0 : index
    %c0_90 = arith.constant 0 : index
    %460 = vector.load %arg11[%c0_89, %c0_90] : memref<1x128xf32, #tpu.memory_space<vmem>>, vector<1x128xf32>
    %461 = vector.broadcast %460 : vector<1x128xf32> to vector<16x128xf32>
    %462 = arith.addf %459, %461 : vector<16x128xf32>
    %c0_91 = arith.constant 0 : index
    %c0_92 = arith.constant 0 : index
    %463 = vector.load %arg12[%c0_91, %c0_92] : memref<16x128xf32, #tpu.memory_space<vmem>>, vector<16x128xf32>
    tpu.vector_store %arg12[%c0_91, %c0_92], %462 {strides = array<i32>} : memref<16x128xf32, #tpu.memory_space<vmem>>, vector<16x128xf32>,
    return
  }
}

</mosaic_0001>

<llo_original>
// kernel: date_normalizer_forward.1
$region0: #{date_normalizer_forward.1}
  #allocation0 [shape = 'u32[]', space=smem, size = 0x4, offset = 0x4, fixed_abs, tag = 'smem constant byte address 0x4 - core index']
  #allocation1 [shape = 'u32[72,128]{1,0:T(1,128)}', space=vmem, size = 0x9000, scoped, tag = 'internal scratch']
  #allocation2 [shape = 'f32[16,32]{1,0:T(8,128)}', space=vmem, size = 0x2000, scoped, tag = 'scratch operand']
  %s0 = inlined_call_operand.vmem [shape: f32[20,32], index: 0, kind: input, shape index: {}]
  %s1 = inlined_call_operand.vmem [shape: f32[16,32], index: 1, kind: input, shape index: {}]
  %s2 = inlined_call_operand.vmem [shape: f32[32,128], index: 2, kind: input, shape index: {}]
  %s3 = inlined_call_operand.vmem [shape: f32[32,128], index: 3, kind: input, shape index: {}]
  %s4 = inlined_call_operand.vmem [shape: f32[1,128], index: 4, kind: input, shape index: {}]
  %s5 = inlined_call_operand.vmem [shape: f32[1,32], index: 5, kind: input, shape index: {}]
  %s6 = inlined_call_operand.vmem [shape: f32[32,128], index: 6, kind: input, shape index: {}]
  %s7 = inlined_call_operand.vmem [shape: f32[32,128], index: 7, kind: input, shape index: {}]
  %s8 = inlined_call_operand.vmem [shape: f32[1,128], index: 8, kind: input, shape index: {}]
  %s9 = inlined_call_operand.vmem [shape: f32[1,32], index: 9, kind: input, shape index: {}]
  %s10 = inlined_call_operand.vmem [shape: f32[32,128], index: 10, kind: input, shape index: {}]
  %s11 = inlined_call_operand.vmem [shape: f32[1,128], index: 11, kind: input, shape index: {}]
  %s12 = inlined_call_operand.vmem [shape: f32[16,128], index: 12, kind: output, shape index: {}]
  %s13 = sld [smem:[#allocation0]]
  $region58: #{date_normalizer_forward.1} parent=0
    _
  %s15 = ssub.s32 1, %s13
  %s16 = scalar_select 0, %s15, %s13
  // Predicated region
  $region2: #{date_normalizer_forward.1} parent=0 // pred_check
    _
  $region3: #{date_normalizer_forward.1} parent=0 // pred_check_branch
    %18 = sbr.rel (0) target = $region5
  $region4: #{date_normalizer_forward.1} parent=0 // pred_region
    _
  $region5: #{date_normalizer_forward.1} parent=0 // pred_fallthru
    _
  // Predicated region
  $region6: #{date_normalizer_forward.1} parent=0 // pred_check
    _
  $region7: #{date_normalizer_forward.1} parent=0 // pred_check_branch
    %20 = sbr.rel (0) target = $region9
  $region8: #{date_normalizer_forward.1} parent=0 // pred_region
    _
  $region9: #{date_normalizer_forward.1} parent=0 // pred_fallthru
    _
  // Predicated region
  $region10: #{date_normalizer_forward.1} parent=0 // pred_check
    _
  $region11: #{date_normalizer_forward.1} parent=0 // pred_check_branch
    %22 = sbr.rel (0) target = $region13
  $region12: #{date_normalizer_forward.1} parent=0 // pred_region
    _
  $region13: #{date_normalizer_forward.1} parent=0 // pred_fallthru
    _
  // Predicated region
  $region14: #{date_normalizer_forward.1} parent=0 // pred_check
    _
  $region15: #{date_normalizer_forward.1} parent=0 // pred_check_branch
    %24 = sbr.rel (0) target = $region17
  $region16: #{date_normalizer_forward.1} parent=0 // pred_region
    _
  $region17: #{date_normalizer_forward.1} parent=0 // pred_fallthru
    _
  // Predicated region
  $region18: #{date_normalizer_forward.1} parent=0 // pred_check
    _
  $region19: #{date_normalizer_forward.1} parent=0 // pred_check_branch
    %26 = sbr.rel (0) target = $region21
  $region20: #{date_normalizer_forward.1} parent=0 // pred_region
    _
  $region21: #{date_normalizer_forward.1} parent=0 // pred_fallthru
    _
  // Predicated region
  $region22: #{date_normalizer_forward.1} parent=0 // pred_check
    _
  $region23: #{date_normalizer_forward.1} parent=0 // pred_check_branch
    %28 = sbr.rel (0) target = $region25
  $region24: #{date_normalizer_forward.1} parent=0 // pred_region
    _
  $region25: #{date_normalizer_forward.1} parent=0 // pred_fallthru
    _
  // Predicated region
  $region26: #{date_normalizer_forward.1} parent=0 // pred_check
    _
  $region27: #{date_normalizer_forward.1} parent=0 // pred_check_branch
    %30 = sbr.rel (0) target = $region29
  $region28: #{date_normalizer_forward.1} parent=0 // pred_region
    _
  $region29: #{date_normalizer_forward.1} parent=0 // pred_fallthru
    _
  // Predicated region
  $region30: #{date_normalizer_forward.1} parent=0 // pred_check
    _
  $region31: #{date_normalizer_forward.1} parent=0 // pred_check_branch
    %32 = sbr.rel (0) target = $region33
  $region32: #{date_normalizer_forward.1} parent=0 // pred_region
    _
  $region33: #{date_normalizer_forward.1} parent=0 // pred_fallthru
    _
  // Predicated region
  $region34: #{date_normalizer_forward.1} parent=0 // pred_check
    _
  $region35: #{date_normalizer_forward.1} parent=0 // pred_check_branch
    %34 = sbr.rel (0) target = $region37
  $region36: #{date_normalizer_forward.1} parent=0 // pred_region
    _
  $region37: #{date_normalizer_forward.1} parent=0 // pred_fallthru
    _
  // Predicated region
  $region38: #{date_normalizer_forward.1} parent=0 // pred_check
    _
  $region39: #{date_normalizer_forward.1} parent=0 // pred_check_branch
    %36 = sbr.rel (0) target = $region41
  $region40: #{date_normalizer_forward.1} parent=0 // pred_region
    _
  $region41: #{date_normalizer_forward.1} parent=0 // pred_fallthru
    _
  // Predicated region
  $region42: #{date_normalizer_forward.1} parent=0 // pred_check
    _
  $region43: #{date_normalizer_forward.1} parent=0 // pred_check_branch
    %38 = sbr.rel (0) target = $region45
  $region44: #{date_normalizer_forward.1} parent=0 // pred_region
    _
  $region45: #{date_normalizer_forward.1} parent=0 // pred_fallthru
    _
  // Predicated region
  $region46: #{date_normalizer_forward.1} parent=0 // pred_check
    _
  $region47: #{date_normalizer_forward.1} parent=0 // pred_check_branch
    %40 = sbr.rel (0) target = $region49
  $region48: #{date_normalizer_forward.1} parent=0 // pred_region
    _
  $region49: #{date_normalizer_forward.1} parent=0 // pred_fallthru
    _
  %v41 = vld [vmem:[%s0] sm:$0xff]
  %v42 = vld [vmem:[%s0 + $0x8] sm:$0xff]
  %v43 = vld [vmem:[%s0 + $0x10] sm:$0xf]
  %v44 = vld [vmem:[%s2] sm:$0xff]
  %v45 = vld [vmem:[%s2 + $0x8] sm:$0xff]
  %v46 = vld [vmem:[%s2 + $0x10] sm:$0xff]
  %v47 = vld [vmem:[%s2 + $0x18] sm:$0xff]
  %v48 = vld [vmem:[%s4] sm:$0x1]
  %v50 = vperm.slane %v48, 0
  %vm52 = vcmask 261120
  %v54 = vsel %vm52, %v41, 0
  %v57 = vsel %vm52, %v42, 0
  %v60 = vsel %vm52, %v43, 0
  %62 = vmatpush.msra.mxu0 0.0
  %63 = vmatpush.msra.mxu0 0.0
  %64 = vmatpush.msra.mxu0 0.0
  %65 = vmatpush.msra.mxu0 0.0
  %66 = vmatpush.msra.mxu0 0.0
  %67 = vmatpush.msra.mxu0 0.0
  %68 = vmatpush.msra.mxu0 0.0
  %69 = vmatpush.msra.mxu0 0.0
  %70 = vmatpush.msra.mxu0 0.0
  %71 = vmatpush.msra.mxu0 0.0
  %72 = vmatpush.msra.mxu0 0.0
  %73 = vmatpush.msra.mxu0 0.0
  %74 = vmatpush.msra.mxu0 %v47
  %75 = vmatpush.msra.mxu0 %v46
  %76 = vmatpush.msra.mxu0 %v45
  %77 = vmatpush.msra.mxu0 %v44
  %78 = vmatmul.f32.gmra.mxu0 %v54
  %v79 = vpop.f32.mrf.mxu0
  %v80 = vadd.f32 %v50, %v79
  %81 = vmatmul.f32.gmra.mxu0 %v57
  %v82 = vpop.f32.mrf.mxu0
  %v83 = vadd.f32 %v50, %v82
  %84 = vmatmul.f32.gmra.mxu0 %v60
  %v85 = vpop.f32.mrf.mxu0
  %v86 = vadd.f32 %v50, %v85
  %87 = vdwg.mxu0
  %v88 = vld [vmem:[%s3] sm:$0xff]
  %v89 = vld [vmem:[%s3 + $0x8] sm:$0xff]
  %v90 = vld [vmem:[%s3 + $0x10] sm:$0xff]
  %v91 = vld [vmem:[%s3 + $0x18] sm:$0xff]
  %v92 = vld [vmem:[%s5] sm:$0x1]
  %v94 = vsel %vm52, 0.0, 0
  %96 = vmatpush.msra.mxu0 0.0
  %97 = vmatpush.msra.mxu0 0.0
  %98 = vmatpush.msra.mxu0 0.0
  %99 = vmatpush.msra.mxu0 0.0
  %100 = vmatpush.msra.mxu0 0.0
  %101 = vmatpush.msra.mxu0 0.0
  %102 = vmatpush.msra.mxu0 0.0
  %103 = vmatpush.msra.mxu0 0.0
  %104 = vmatpush.msra.mxu0 0.0
  %105 = vmatpush.msra.mxu0 0.0
  %106 = vmatpush.msra.mxu0 0.0
  %107 = vmatpush.msra.mxu0 0.0
  %108 = vmatpush.msra.mxu0 %v91
  %109 = vmatpush.msra.mxu0 %v90
  %110 = vmatpush.msra.mxu0 %v89
  %111 = vmatpush.msra.mxu0 %v88
  %112 = vmatmul.f32.gmra.mxu0 %v94
  %v113 = vpop.f32.mrf.mxu0
  %v114 = vadd.f32 0.0, %v113
  %115 = vdwg.mxu0
  %v116 = vadd.f32 %v80, %v114
  %v117 = vxor.u32 %v116, 2147483648
  %v118 = vmul.f32 %v117, 1.442695
  %v119 = vpow.pop %v118
  %v120 = vadd.f32 %v119, 1.0
  %v121 = vrcp.pop %v120
  %v122 = vmul.f32 %v120, %v121
  %v123 = vsub.f32 1.0, %v122
  %v124 = vmul.f32 %v121, %v123
  %v125 = vadd.f32 %v121, %v124
  %vm126 = vweird.f32 %v120
  %vm127 = vweird.f32 %v121
  %vm128 = vmor %vm126, %vm127
  %v129 = vsel %vm128, %v121, %v125
  %v130 = vand.u32 2147483647, %v120
  %vm131 = vcmp.eq.f32.partialorder %v130, 8.507059e+37
  %v132 = vand.u32 %v120, 2147483648
  %v133 = vor.u32 1.1754944e-38, %v132
  %v134 = vsel %vm131, %v133, %v129
  %v135 = vmul.f32 1.0, %v134
  %v137 = vperm.slane %v92, 0
  %138 = vrot.lane.b32.xlu0 %v137, 64
  %v139 = vpop.permute.xlu0 %138
  %v141 = vadd.f32 %v114, %v139
  %143 = vrot.lane.b32.xlu0 %v141, 64
  %v144 = vpop.permute.xlu0 %143
  %v146 = vmul.f32 %v135, %v144
  %148 = vrot.lane.b32.xlu0 %v146, 64
  %v149 = vpop.permute.xlu0 %148
  %v151 = vadd.f32 %v80, %v149
  %v152 = vtanh.pop %v151
  %v153 = vsub.f32 1.0, %v135
  %155 = vrot.lane.b32.xlu0 %v152, 96
  %v156 = vpop.permute.xlu0 %155
  %v158 = vmul.f32 %v153, %v156
  %v159 = vmul.f32 %v135, 0.0
  %v160 = vadd.f32 %v158, %v159
  %162 = vrot.lane.b32.xlu0 %v160, 96
  %v163 = vpop.permute.xlu0 %162
  %v164 = vsel %vm52, %v163, 0
  %166 = vmatpush.msra.mxu0 0.0
  %167 = vmatpush.msra.mxu0 0.0
  %168 = vmatpush.msra.mxu0 0.0
  %169 = vmatpush.msra.mxu0 0.0
  %170 = vmatpush.msra.mxu0 0.0
  %171 = vmatpush.msra.mxu0 0.0
  %172 = vmatpush.msra.mxu0 0.0
  %173 = vmatpush.msra.mxu0 0.0
  %174 = vmatpush.msra.mxu0 0.0
  %175 = vmatpush.msra.mxu0 0.0
  %176 = vmatpush.msra.mxu0 0.0
  %177 = vmatpush.msra.mxu0 0.0
  %178 = vmatpush.msra.mxu0 %v91
  %179 = vmatpush.msra.mxu0 %v90
  %180 = vmatpush.msra.mxu0 %v89
  %181 = vmatpush.msra.mxu0 %v88
  %182 = vmatmul.f32.gmra.mxu0 %v164
  %v183 = vpop.f32.mrf.mxu0
  %v184 = vadd.f32 0.0, %v183
  %185 = vdwg.mxu0
  %v187 = vrot.slane %v184, 6
  %v189 = vadd.f32 %v80, %v187
  %v190 = vxor.u32 %v189, 2147483648
  %v191 = vmul.f32 %v190, 1.442695
  %v192 = vpow.pop %v191
  %v193 = vadd.f32 %v192, 1.0
  %v194 = vrcp.pop %v193
  %v195 = vmul.f32 %v193, %v194
  %v196 = vsub.f32 1.0, %v195
  %v197 = vmul.f32 %v194, %v196
  %v198 = vadd.f32 %v194, %v197
  %vm199 = vweird.f32 %v193
  %vm200 = vweird.f32 %v194
  %vm201 = vmor %vm199, %vm200
  %v202 = vsel %vm201, %v194, %v198
  %v203 = vand.u32 2147483647, %v193
  %vm204 = vcmp.eq.f32.partialorder %v203, 8.507059e+37
  %v205 = vand.u32 %v193, 2147483648
  %v206 = vor.u32 1.1754944e-38, %v205
  %v207 = vsel %vm204, %v206, %v202
  %v208 = vmul.f32 1.0, %v207
  %v209 = vadd.f32 %v184, %v139
  %v211 = vrot.slane %v209, 6
  %212 = vrot.lane.b32.xlu0 %v211, 64
  %v213 = vpop.permute.xlu0 %212
  %v215 = vmul.f32 %v208, %v213
  %217 = vrot.lane.b32.xlu0 %v215, 64
  %v218 = vpop.permute.xlu0 %217
  %v220 = vadd.f32 %v80, %v218
  %v221 = vtanh.pop %v220
  %v222 = vsub.f32 1.0, %v208
  %224 = vrot.lane.b32.xlu0 %v221, 96
  %v225 = vpop.permute.xlu0 %224
  %v227 = vmul.f32 %v222, %v225
  %v228 = vrot.slane %v160, 6
  %v230 = vmul.f32 %v208, %v228
  %v231 = vadd.f32 %v227, %v230
  %v233 = vrot.slane %v231, 2
  %234 = vrot.lane.b32.xlu0 %v233, 96
  %v235 = vpop.permute.xlu0 %234
  %v236 = vsel %vm52, %v235, 0
  %238 = vmatpush.msra.mxu0 0.0
  %239 = vmatpush.msra.mxu0 0.0
  %240 = vmatpush.msra.mxu0 0.0
  %241 = vmatpush.msra.mxu0 0.0
  %242 = vmatpush.msra.mxu0 0.0
  %243 = vmatpush.msra.mxu0 0.0
  %244 = vmatpush.msra.mxu0 0.0
  %245 = vmatpush.msra.mxu0 0.0
  %246 = vmatpush.msra.mxu0 0.0
  %247 = vmatpush.msra.mxu0 0.0
  %248 = vmatpush.msra.mxu0 0.0
  %249 = vmatpush.msra.mxu0 0.0
  %250 = vmatpush.msra.mxu0 %v91
  %251 = vmatpush.msra.mxu0 %v90
  %252 = vmatpush.msra.mxu0 %v89
  %253 = vmatpush.msra.mxu0 %v88
  %254 = vmatmul.f32.gmra.mxu0 %v236
  %v255 = vpop.f32.mrf.mxu0
  %v256 = vadd.f32 0.0, %v255
  %257 = vdwg.mxu0
  %v259 = vrot.slane %v256, 4
  %v261 = vadd.f32 %v80, %v259
  %v262 = vxor.u32 %v261, 2147483648
  %v263 = vmul.f32 %v262, 1.442695
  %v264 = vpow.pop %v263
  %v265 = vadd.f32 %v264, 1.0
  %v266 = vrcp.pop %v265
  %v267 = vmul.f32 %v265, %v266
  %v268 = vsub.f32 1.0, %v267
  %v269 = vmul.f32 %v266, %v268
  %v270 = vadd.f32 %v266, %v269
  %vm271 = vweird.f32 %v265
  %vm272 = vweird.f32 %v266
  %vm273 = vmor %vm271, %vm272
  %v274 = vsel %vm273, %v266, %v270
  %v275 = vand.u32 2147483647, %v265
  %vm276 = vcmp.eq.f32.partialorder %v275, 8.507059e+37
  %v277 = vand.u32 %v265, 2147483648
  %v278 = vor.u32 1.1754944e-38, %v277
  %v279 = vsel %vm276, %v278, %v274
  %v280 = vmul.f32 1.0, %v279
  %v281 = vadd.f32 %v256, %v139
  %v283 = vrot.slane %v281, 4
  %284 = vrot.lane.b32.xlu0 %v283, 64
  %v285 = vpop.permute.xlu0 %284
  %v287 = vmul.f32 %v280, %v285
  %289 = vrot.lane.b32.xlu0 %v287, 64
  %v290 = vpop.permute.xlu0 %289
  %v292 = vadd.f32 %v80, %v290
  %v293 = vtanh.pop %v292
  %v294 = vsub.f32 1.0, %v280
  %296 = vrot.lane.b32.xlu0 %v293, 96
  %v297 = vpop.permute.xlu0 %296
  %v299 = vmul.f32 %v294, %v297
  %v300 = vrot.slane %v231, 6
  %v302 = vmul.f32 %v280, %v300
  %v303 = vadd.f32 %v299, %v302
  %v305 = vrot.slane %v303, 4
  %306 = vrot.lane.b32.xlu0 %v305, 96
  %v307 = vpop.permute.xlu0 %306
  %v308 = vsel %vm52, %v307, 0
  %310 = vmatpush.msra.mxu0 0.0
  %311 = vmatpush.msra.mxu0 0.0
  %312 = vmatpush.msra.mxu0 0.0
  %313 = vmatpush.msra.mxu0 0.0
  %314 = vmatpush.msra.mxu0 0.0
  %315 = vmatpush.msra.mxu0 0.0
  %316 = vmatpush.msra.mxu0 0.0
  %317 = vmatpush.msra.mxu0 0.0
  %318 = vmatpush.msra.mxu0 0.0
  %319 = vmatpush.msra.mxu0 0.0
  %320 = vmatpush.msra.mxu0 0.0
  %321 = vmatpush.msra.mxu0 0.0
  %322 = vmatpush.msra.mxu0 %v91
  %323 = vmatpush.msra.mxu0 %v90
  %324 = vmatpush.msra.mxu0 %v89
  %325 = vmatpush.msra.mxu0 %v88
  %326 = vmatmul.f32.gmra.mxu0 %v308
  %v327 = vpop.f32.mrf.mxu0
  %v328 = vadd.f32 0.0, %v327
  %329 = vdwg.mxu0
  %v331 = vrot.slane %v328, 2
  %v333 = vadd.f32 %v80, %v331
  %v334 = vxor.u32 %v333, 2147483648
  %v335 = vmul.f32 %v334, 1.442695
  %v336 = vpow.pop %v335
  %v337 = vadd.f32 %v336, 1.0
  %v338 = vrcp.pop %v337
  %v339 = vmul.f32 %v337, %v338
  %v340 = vsub.f32 1.0, %v339
  %v341 = vmul.f32 %v338, %v340
  %v342 = vadd.f32 %v338, %v341
  %vm343 = vweird.f32 %v337
  %vm344 = vweird.f32 %v338
  %vm345 = vmor %vm343, %vm344
  %v346 = vsel %vm345, %v338, %v342
  %v347 = vand.u32 2147483647, %v337
  %vm348 = vcmp.eq.f32.partialorder %v347, 8.507059e+37
  %v349 = vand.u32 %v337, 2147483648
  %v350 = vor.u32 1.1754944e-38, %v349
  %v351 = vsel %vm348, %v350, %v346
  %v352 = vmul.f32 1.0, %v351
  %v353 = vadd.f32 %v328, %v139
  %v355 = vrot.slane %v353, 2
  %356 = vrot.lane.b32.xlu0 %v355, 64
  %v357 = vpop.permute.xlu0 %356
  %v359 = vmul.f32 %v352, %v357
  %361 = vrot.lane.b32.xlu0 %v359, 64
  %v362 = vpop.permute.xlu0 %361
  %v364 = vadd.f32 %v80, %v362
  %v365 = vtanh.pop %v364
  %v366 = vsub.f32 1.0, %v352
  %368 = vrot.lane.b32.xlu0 %v365, 96
  %v369 = vpop.permute.xlu0 %368
  %v371 = vmul.f32 %v366, %v369
  %v372 = vrot.slane %v303, 6
  %v374 = vmul.f32 %v352, %v372
  %v375 = vadd.f32 %v371, %v374
  %v377 = vrot.slane %v375, 6
  %378 = vrot.lane.b32.xlu0 %v377, 96
  %v379 = vpop.permute.xlu0 %378
  %v380 = vsel %vm52, %v379, 0
  %382 = vmatpush.msra.mxu0 0.0
  %383 = vmatpush.msra.mxu0 0.0
  %384 = vmatpush.msra.mxu0 0.0
  %385 = vmatpush.msra.mxu0 0.0
  %386 = vmatpush.msra.mxu0 0.0
  %387 = vmatpush.msra.mxu0 0.0
  %388 = vmatpush.msra.mxu0 0.0
  %389 = vmatpush.msra.mxu0 0.0
  %390 = vmatpush.msra.mxu0 0.0
  %391 = vmatpush.msra.mxu0 0.0
  %392 = vmatpush.msra.mxu0 0.0
  %393 = vmatpush.msra.mxu0 0.0
  %394 = vmatpush.msra.mxu0 %v91
  %395 = vmatpush.msra.mxu0 %v90
  %396 = vmatpush.msra.mxu0 %v89
  %397 = vmatpush.msra.mxu0 %v88
  %398 = vmatmul.f32.gmra.mxu0 %v380
  %v399 = vpop.f32.mrf.mxu0
  %v400 = vadd.f32 0.0, %v399
  %401 = vdwg.mxu0
  %v402 = vadd.f32 %v83, %v400
  %v403 = vxor.u32 %v402, 2147483648
  %v404 = vmul.f32 %v403, 1.442695
  %v405 = vpow.pop %v404
  %v406 = vadd.f32 %v405, 1.0
  %v407 = vrcp.pop %v406
  %v408 = vmul.f32 %v406, %v407
  %v409 = vsub.f32 1.0, %v408
  %v410 = vmul.f32 %v407, %v409
  %v411 = vadd.f32 %v407, %v410
  %vm412 = vweird.f32 %v406
  %vm413 = vweird.f32 %v407
  %vm414 = vmor %vm412, %vm413
  %v415 = vsel %vm414, %v407, %v411
  %v416 = vand.u32 2147483647, %v406
  %vm417 = vcmp.eq.f32.partialorder %v416, 8.507059e+37
  %v418 = vand.u32 %v406, 2147483648
  %v419 = vor.u32 1.1754944e-38, %v418
  %v420 = vsel %vm417, %v419, %v415
  %v421 = vmul.f32 1.0, %v420
  %v422 = vadd.f32 %v400, %v139
  %424 = vrot.lane.b32.xlu0 %v422, 64
  %v425 = vpop.permute.xlu0 %424
  %v427 = vmul.f32 %v421, %v425
  %429 = vrot.lane.b32.xlu0 %v427, 64
  %v430 = vpop.permute.xlu0 %429
  %v432 = vadd.f32 %v83, %v430
  %v433 = vtanh.pop %v432
  %v434 = vsub.f32 1.0, %v421
  %436 = vrot.lane.b32.xlu0 %v433, 96
  %v437 = vpop.permute.xlu0 %436
  %v439 = vmul.f32 %v434, %v437
  %v441 = vmul.f32 %v421, %v377
  %v442 = vadd.f32 %v439, %v441
  %444 = vrot.lane.b32.xlu0 %v442, 96
  %v445 = vpop.permute.xlu0 %444
  %v446 = vsel %vm52, %v445, 0
  %448 = vmatpush.msra.mxu0 0.0
  %449 = vmatpush.msra.mxu0 0.0
  %450 = vmatpush.msra.mxu0 0.0
  %451 = vmatpush.msra.mxu0 0.0
  %452 = vmatpush.msra.mxu0 0.0
  %453 = vmatpush.msra.mxu0 0.0
  %454 = vmatpush.msra.mxu0 0.0
  %455 = vmatpush.msra.mxu0 0.0
  %456 = vmatpush.msra.mxu0 0.0
  %457 = vmatpush.msra.mxu0 0.0
  %458 = vmatpush.msra.mxu0 0.0
  %459 = vmatpush.msra.mxu0 0.0
  %460 = vmatpush.msra.mxu0 %v91
  %461 = vmatpush.msra.mxu0 %v90
  %462 = vmatpush.msra.mxu0 %v89
  %463 = vmatpush.msra.mxu0 %v88
  %464 = vmatmul.f32.gmra.mxu0 %v446
  %v465 = vpop.f32.mrf.mxu0
  %v466 = vadd.f32 0.0, %v465
  %467 = vdwg.mxu0
  %v469 = vrot.slane %v466, 6
  %v471 = vadd.f32 %v83, %v469
  %v472 = vxor.u32 %v471, 2147483648
  %v473 = vmul.f32 %v472, 1.442695
  %v474 = vpow.pop %v473
  %v475 = vadd.f32 %v474, 1.0
  %v476 = vrcp.pop %v475
  %v477 = vmul.f32 %v475, %v476
  %v478 = vsub.f32 1.0, %v477
  %v479 = vmul.f32 %v476, %v478
  %v480 = vadd.f32 %v476, %v479
  %vm481 = vweird.f32 %v475
  %vm482 = vweird.f32 %v476
  %vm483 = vmor %vm481, %vm482
  %v484 = vsel %vm483, %v476, %v480
  %v485 = vand.u32 2147483647, %v475
  %vm486 = vcmp.eq.f32.partialorder %v485, 8.507059e+37
  %v487 = vand.u32 %v475, 2147483648
  %v488 = vor.u32 1.1754944e-38, %v487
  %v489 = vsel %vm486, %v488, %v484
  %v490 = vmul.f32 1.0, %v489
  %v491 = vadd.f32 %v466, %v139
  %v493 = vrot.slane %v491, 6
  %494 = vrot.lane.b32.xlu0 %v493, 64
  %v495 = vpop.permute.xlu0 %494
  %v497 = vmul.f32 %v490, %v495
  %499 = vrot.lane.b32.xlu0 %v497, 64
  %v500 = vpop.permute.xlu0 %499
  %v502 = vadd.f32 %v83, %v500
  %v503 = vtanh.pop %v502
  %v504 = vsub.f32 1.0, %v490
  %506 = vrot.lane.b32.xlu0 %v503, 96
  %v507 = vpop.permute.xlu0 %506
  %v509 = vmul.f32 %v504, %v507
  %v510 = vrot.slane %v442, 6
  %v512 = vmul.f32 %v490, %v510
  %v513 = vadd.f32 %v509, %v512
  %v515 = vrot.slane %v513, 2
  %516 = vrot.lane.b32.xlu0 %v515, 96
  %v517 = vpop.permute.xlu0 %516
  %v518 = vsel %vm52, %v517, 0
  %520 = vmatpush.msra.mxu0 0.0
  %521 = vmatpush.msra.mxu0 0.0
  %522 = vmatpush.msra.mxu0 0.0
  %523 = vmatpush.msra.mxu0 0.0
  %524 = vmatpush.msra.mxu0 0.0
  %525 = vmatpush.msra.mxu0 0.0
  %526 = vmatpush.msra.mxu0 0.0
  %527 = vmatpush.msra.mxu0 0.0
  %528 = vmatpush.msra.mxu0 0.0
  %529 = vmatpush.msra.mxu0 0.0
  %530 = vmatpush.msra.mxu0 0.0
  %531 = vmatpush.msra.mxu0 0.0
  %532 = vmatpush.msra.mxu0 %v91
  %533 = vmatpush.msra.mxu0 %v90
  %534 = vmatpush.msra.mxu0 %v89
  %535 = vmatpush.msra.mxu0 %v88
  %536 = vmatmul.f32.gmra.mxu0 %v518
  %v537 = vpop.f32.mrf.mxu0
  %v538 = vadd.f32 0.0, %v537
  %539 = vdwg.mxu0
  %v541 = vrot.slane %v538, 4
  %v543 = vadd.f32 %v83, %v541
  %v544 = vxor.u32 %v543, 2147483648
  %v545 = vmul.f32 %v544, 1.442695
  %v546 = vpow.pop %v545
  %v547 = vadd.f32 %v546, 1.0
  %v548 = vrcp.pop %v547
  %v549 = vmul.f32 %v547, %v548
  %v550 = vsub.f32 1.0, %v549
  %v551 = vmul.f32 %v548, %v550
  %v552 = vadd.f32 %v548, %v551
  %vm553 = vweird.f32 %v547
  %vm554 = vweird.f32 %v548
  %vm555 = vmor %vm553, %vm554
  %v556 = vsel %vm555, %v548, %v552
  %v557 = vand.u32 2147483647, %v547
  %vm558 = vcmp.eq.f32.partialorder %v557, 8.507059e+37
  %v559 = vand.u32 %v547, 2147483648
  %v560 = vor.u32 1.1754944e-38, %v559
  %v561 = vsel %vm558, %v560, %v556
  %v562 = vmul.f32 1.0, %v561
  %v563 = vadd.f32 %v538, %v139
  %v565 = vrot.slane %v563, 4
  %566 = vrot.lane.b32.xlu0 %v565, 64
  %v567 = vpop.permute.xlu0 %566
  %v569 = vmul.f32 %v562, %v567
  %571 = vrot.lane.b32.xlu0 %v569, 64
  %v572 = vpop.permute.xlu0 %571
  %v574 = vadd.f32 %v83, %v572
  %v575 = vtanh.pop %v574
  %v576 = vsub.f32 1.0, %v562
  %578 = vrot.lane.b32.xlu0 %v575, 96
  %v579 = vpop.permute.xlu0 %578
  %v581 = vmul.f32 %v576, %v579
  %v582 = vrot.slane %v513, 6
  %v584 = vmul.f32 %v562, %v582
  %v585 = vadd.f32 %v581, %v584
  %v587 = vrot.slane %v585, 4
  %588 = vrot.lane.b32.xlu0 %v587, 96
  %v589 = vpop.permute.xlu0 %588
  %v590 = vsel %vm52, %v589, 0
  %592 = vmatpush.msra.mxu0 0.0
  %593 = vmatpush.msra.mxu0 0.0
  %594 = vmatpush.msra.mxu0 0.0
  %595 = vmatpush.msra.mxu0 0.0
  %596 = vmatpush.msra.mxu0 0.0
  %597 = vmatpush.msra.mxu0 0.0
  %598 = vmatpush.msra.mxu0 0.0
  %599 = vmatpush.msra.mxu0 0.0
  %600 = vmatpush.msra.mxu0 0.0
  %601 = vmatpush.msra.mxu0 0.0
  %602 = vmatpush.msra.mxu0 0.0
  %603 = vmatpush.msra.mxu0 0.0
  %604 = vmatpush.msra.mxu0 %v91
  %605 = vmatpush.msra.mxu0 %v90
  %606 = vmatpush.msra.mxu0 %v89
  %607 = vmatpush.msra.mxu0 %v88
  %608 = vmatmul.f32.gmra.mxu0 %v590
  %v609 = vpop.f32.mrf.mxu0
  %v610 = vadd.f32 0.0, %v609
  %611 = vdwg.mxu0
  %v613 = vrot.slane %v610, 2
  %v615 = vadd.f32 %v83, %v613
  %v616 = vxor.u32 %v615, 2147483648
  %v617 = vmul.f32 %v616, 1.442695
  %v618 = vpow.pop %v617
  %v619 = vadd.f32 %v618, 1.0
  %v620 = vrcp.pop %v619
  %v621 = vmul.f32 %v619, %v620
  %v622 = vsub.f32 1.0, %v621
  %v623 = vmul.f32 %v620, %v622
  %v624 = vadd.f32 %v620, %v623
  %vm625 = vweird.f32 %v619
  %vm626 = vweird.f32 %v620
  %vm627 = vmor %vm625, %vm626
  %v628 = vsel %vm627, %v620, %v624
  %v629 = vand.u32 2147483647, %v619
  %vm630 = vcmp.eq.f32.partialorder %v629, 8.507059e+37
  %v631 = vand.u32 %v619, 2147483648
  %v632 = vor.u32 1.1754944e-38, %v631
  %v633 = vsel %vm630, %v632, %v628
  %v634 = vmul.f32 1.0, %v633
  %v635 = vadd.f32 %v610, %v139
  %v637 = vrot.slane %v635, 2
  %638 = vrot.lane.b32.xlu0 %v637, 64
  %v639 = vpop.permute.xlu0 %638
  %v641 = vmul.f32 %v634, %v639
  %643 = vrot.lane.b32.xlu0 %v641, 64
  %v644 = vpop.permute.xlu0 %643
  %v646 = vadd.f32 %v83, %v644
  %v647 = vtanh.pop %v646
  %v648 = vsub.f32 1.0, %v634
  %650 = vrot.lane.b32.xlu0 %v647, 96
  %v651 = vpop.permute.xlu0 %650
  %v653 = vmul.f32 %v648, %v651
  %v654 = vrot.slane %v585, 6
  %v656 = vmul.f32 %v634, %v654
  %v657 = vadd.f32 %v653, %v656
  %v659 = vrot.slane %v657, 6
  %660 = vrot.lane.b32.xlu0 %v659, 96
  %v661 = vpop.permute.xlu0 %660
  %v662 = vsel %vm52, %v661, 0
  %664 = vmatpush.msra.mxu0 0.0
  %665 = vmatpush.msra.mxu0 0.0
  %666 = vmatpush.msra.mxu0 0.0
  %667 = vmatpush.msra.mxu0 0.0
  %668 = vmatpush.msra.mxu0 0.0
  %669 = vmatpush.msra.mxu0 0.0
  %670 = vmatpush.msra.mxu0 0.0
  %671 = vmatpush.msra.mxu0 0.0
  %672 = vmatpush.msra.mxu0 0.0
  %673 = vmatpush.msra.mxu0 0.0
  %674 = vmatpush.msra.mxu0 0.0
  %675 = vmatpush.msra.mxu0 0.0
  %676 = vmatpush.msra.mxu0 %v91
  %677 = vmatpush.msra.mxu0 %v90
  %678 = vmatpush.msra.mxu0 %v89
  %679 = vmatpush.msra.mxu0 %v88
  %680 = vmatmul.f32.gmra.mxu0 %v662
  %v681 = vpop.f32.mrf.mxu0
  %v682 = vadd.f32 0.0, %v681
  %683 = vdwg.mxu0
  %v684 = vadd.f32 %v86, %v682
  %v685 = vxor.u32 %v684, 2147483648
  %v686 = vmul.f32 %v685, 1.442695
  %v687 = vpow.pop %v686
  %v688 = vadd.f32 %v687, 1.0
  %v689 = vrcp.pop %v688
  %v690 = vmul.f32 %v688, %v689
  %v691 = vsub.f32 1.0, %v690
  %v692 = vmul.f32 %v689, %v691
  %v693 = vadd.f32 %v689, %v692
  %vm694 = vweird.f32 %v688
  %vm695 = vweird.f32 %v689
  %vm696 = vmor %vm694, %vm695
  %v697 = vsel %vm696, %v689, %v693
  %v698 = vand.u32 2147483647, %v688
  %vm699 = vcmp.eq.f32.partialorder %v698, 8.507059e+37
  %v700 = vand.u32 %v688, 2147483648
  %v701 = vor.u32 1.1754944e-38, %v700
  %v702 = vsel %vm699, %v701, %v697
  %v703 = vmul.f32 1.0, %v702
  %v704 = vadd.f32 %v682, %v139
  %706 = vrot.lane.b32.xlu0 %v704, 64
  %v707 = vpop.permute.xlu0 %706
  %v709 = vmul.f32 %v703, %v707
  %711 = vrot.lane.b32.xlu0 %v709, 64
  %v712 = vpop.permute.xlu0 %711
  %v714 = vadd.f32 %v86, %v712
  %v715 = vtanh.pop %v714
  %v716 = vsub.f32 1.0, %v703
  %718 = vrot.lane.b32.xlu0 %v715, 96
  %v719 = vpop.permute.xlu0 %718
  %v721 = vmul.f32 %v716, %v719
  %v723 = vmul.f32 %v703, %v659
  %v724 = vadd.f32 %v721, %v723
  %726 = vrot.lane.b32.xlu0 %v724, 96
  %v727 = vpop.permute.xlu0 %726
  %v728 = vsel %vm52, %v727, 0
  %730 = vmatpush.msra.mxu0 0.0
  %731 = vmatpush.msra.mxu0 0.0
  %732 = vmatpush.msra.mxu0 0.0
  %733 = vmatpush.msra.mxu0 0.0
  %734 = vmatpush.msra.mxu0 0.0
  %735 = vmatpush.msra.mxu0 0.0
  %736 = vmatpush.msra.mxu0 0.0
  %737 = vmatpush.msra.mxu0 0.0
  %738 = vmatpush.msra.mxu0 0.0
  %739 = vmatpush.msra.mxu0 0.0
  %740 = vmatpush.msra.mxu0 0.0
  %741 = vmatpush.msra.mxu0 0.0
  %742 = vmatpush.msra.mxu0 %v91
  %743 = vmatpush.msra.mxu0 %v90
  %744 = vmatpush.msra.mxu0 %v89
  %745 = vmatpush.msra.mxu0 %v88
  %746 = vmatmul.f32.gmra.mxu0 %v728
  %v747 = vpop.f32.mrf.mxu0
  %v748 = vadd.f32 0.0, %v747
  %749 = vdwg.mxu0
  %v751 = vrot.slane %v748, 6
  %v753 = vadd.f32 %v86, %v751
  %v754 = vxor.u32 %v753, 2147483648
  %v755 = vmul.f32 %v754, 1.442695
  %v756 = vpow.pop %v755
  %v757 = vadd.f32 %v756, 1.0
  %v758 = vrcp.pop %v757
  %v759 = vmul.f32 %v757, %v758
  %v760 = vsub.f32 1.0, %v759
  %v761 = vmul.f32 %v758, %v760
  %v762 = vadd.f32 %v758, %v761
  %vm763 = vweird.f32 %v757
  %vm764 = vweird.f32 %v758
  %vm765 = vmor %vm763, %vm764
  %v766 = vsel %vm765, %v758, %v762
  %v767 = vand.u32 2147483647, %v757
  %vm768 = vcmp.eq.f32.partialorder %v767, 8.507059e+37
  %v769 = vand.u32 %v757, 2147483648
  %v770 = vor.u32 1.1754944e-38, %v769
  %v771 = vsel %vm768, %v770, %v766
  %v772 = vmul.f32 1.0, %v771
  %v773 = vadd.f32 %v748, %v139
  %v775 = vrot.slane %v773, 6
  %776 = vrot.lane.b32.xlu0 %v775, 64
  %v777 = vpop.permute.xlu0 %776
  %v779 = vmul.f32 %v772, %v777
  %781 = vrot.lane.b32.xlu0 %v779, 64
  %v782 = vpop.permute.xlu0 %781
  %v784 = vadd.f32 %v86, %v782
  %v785 = vtanh.pop %v784
  %v786 = vsub.f32 1.0, %v772
  %788 = vrot.lane.b32.xlu0 %v785, 96
  %v789 = vpop.permute.xlu0 %788
  %v791 = vmul.f32 %v786, %v789
  %v792 = vrot.slane %v724, 6
  %v794 = vmul.f32 %v772, %v792
  %v795 = vadd.f32 %v791, %v794
  %v796 = vld [vmem:[%s1] sm:$0xff]
  %v797 = vld [vmem:[%s1 + $0x8] sm:$0xff]
  %v798 = vld [vmem:[%s6] sm:$0xff]
  %v799 = vld [vmem:[%s6 + $0x8] sm:$0xff]
  %v800 = vld [vmem:[%s6 + $0x10] sm:$0xff]
  %v801 = vld [vmem:[%s6 + $0x18] sm:$0xff]
  %v802 = vld [vmem:[%s8] sm:$0x1]
  %v804 = vperm.slane %v802, 0
  %v807 = vsel %vm52, %v796, 0
  %v810 = vsel %vm52, %v797, 0
  %812 = vmatpush.msra.mxu0 0.0
  %813 = vmatpush.msra.mxu0 0.0
  %814 = vmatpush.msra.mxu0 0.0
  %815 = vmatpush.msra.mxu0 0.0
  %816 = vmatpush.msra.mxu0 0.0
  %817 = vmatpush.msra.mxu0 0.0
  %818 = vmatpush.msra.mxu0 0.0
  %819 = vmatpush.msra.mxu0 0.0
  %820 = vmatpush.msra.mxu0 0.0
  %821 = vmatpush.msra.mxu0 0.0
  %822 = vmatpush.msra.mxu0 0.0
  %823 = vmatpush.msra.mxu0 0.0
  %824 = vmatpush.msra.mxu0 %v801
  %825 = vmatpush.msra.mxu0 %v800
  %826 = vmatpush.msra.mxu0 %v799
  %827 = vmatpush.msra.mxu0 %v798
  %828 = vmatmul.f32.gmra.mxu0 %v807
  %v829 = vpop.f32.mrf.mxu0
  %v830 = vadd.f32 %v804, %v829
  %831 = vmatmul.f32.gmra.mxu0 %v810
  %v832 = vpop.f32.mrf.mxu0
  %v833 = vadd.f32 %v804, %v832
  %834 = vdwg.mxu0
  %v835 = vld [vmem:[%s7] sm:$0xff]
  %v836 = vld [vmem:[%s7 + $0x8] sm:$0xff]
  %v837 = vld [vmem:[%s7 + $0x10] sm:$0xff]
  %v838 = vld [vmem:[%s7 + $0x18] sm:$0xff]
  %v839 = vld [vmem:[%s9] sm:$0x1]
  %v841 = vrot.slane %v795, 2
  %842 = vrot.lane.b32.xlu0 %v841, 96
  %v843 = vpop.permute.xlu0 %842
  %v844 = vsel %vm52, %v843, 0
  %846 = vmatpush.msra.mxu0 0.0
  %847 = vmatpush.msra.mxu0 0.0
  %848 = vmatpush.msra.mxu0 0.0
  %849 = vmatpush.msra.mxu0 0.0
  %850 = vmatpush.msra.mxu0 0.0
  %851 = vmatpush.msra.mxu0 0.0
  %852 = vmatpush.msra.mxu0 0.0
  %853 = vmatpush.msra.mxu0 0.0
  %854 = vmatpush.msra.mxu0 0.0
  %855 = vmatpush.msra.mxu0 0.0
  %856 = vmatpush.msra.mxu0 0.0
  %857 = vmatpush.msra.mxu0 0.0
  %858 = vmatpush.msra.mxu0 %v838
  %859 = vmatpush.msra.mxu0 %v837
  %860 = vmatpush.msra.mxu0 %v836
  %861 = vmatpush.msra.mxu0 %v835
  %862 = vmatmul.f32.gmra.mxu0 %v844
  %v863 = vpop.f32.mrf.mxu0
  %v864 = vadd.f32 0.0, %v863
  %865 = vdwg.mxu0
  %v866 = vadd.f32 %v830, %v864
  %v867 = vxor.u32 %v866, 2147483648
  %v868 = vmul.f32 %v867, 1.442695
  %v869 = vpow.pop %v868
  %v870 = vadd.f32 %v869, 1.0
  %v871 = vrcp.pop %v870
  %v872 = vmul.f32 %v870, %v871
  %v873 = vsub.f32 1.0, %v872
  %v874 = vmul.f32 %v871, %v873
  %v875 = vadd.f32 %v871, %v874
  %vm876 = vweird.f32 %v870
  %vm877 = vweird.f32 %v871
  %vm878 = vmor %vm876, %vm877
  %v879 = vsel %vm878, %v871, %v875
  %v880 = vand.u32 2147483647, %v870
  %vm881 = vcmp.eq.f32.partialorder %v880, 8.507059e+37
  %v882 = vand.u32 %v870, 2147483648
  %v883 = vor.u32 1.1754944e-38, %v882
  %v884 = vsel %vm881, %v883, %v879
  %v885 = vmul.f32 1.0, %v884
  %v887 = vperm.slane %v839, 0
  %888 = vrot.lane.b32.xlu0 %v887, 64
  %v889 = vpop.permute.xlu0 %888
  %v891 = vadd.f32 %v864, %v889
  %893 = vrot.lane.b32.xlu0 %v891, 64
  %v894 = vpop.permute.xlu0 %893
  %v896 = vmul.f32 %v885, %v894
  %898 = vrot.lane.b32.xlu0 %v896, 64
  %v899 = vpop.permute.xlu0 %898
  %v901 = vadd.f32 %v830, %v899
  %v902 = vtanh.pop %v901
  %v903 = vsub.f32 1.0, %v885
  %905 = vrot.lane.b32.xlu0 %v902, 96
  %v906 = vpop.permute.xlu0 %905
  %v908 = vmul.f32 %v903, %v906
  %v910 = vmul.f32 %v885, %v841
  %v911 = vadd.f32 %v908, %v910
  %913 = vrot.lane.b32.xlu0 %v911, 96
  %v914 = vpop.permute.xlu0 %913
  %vm916 = vcmask 254976
  %917 = vst.msk [vmem:[#allocation2] sm:$0x3] %vm916, %v914
  %v918 = vsel %vm52, %v914, 0
  %920 = vmatpush.msra.mxu0 0.0
  %921 = vmatpush.msra.mxu0 0.0
  %922 = vmatpush.msra.mxu0 0.0
  %923 = vmatpush.msra.mxu0 0.0
  %924 = vmatpush.msra.mxu0 0.0
  %925 = vmatpush.msra.mxu0 0.0
  %926 = vmatpush.msra.mxu0 0.0
  %927 = vmatpush.msra.mxu0 0.0
  %928 = vmatpush.msra.mxu0 0.0
  %929 = vmatpush.msra.mxu0 0.0
  %930 = vmatpush.msra.mxu0 0.0
  %931 = vmatpush.msra.mxu0 0.0
  %932 = vmatpush.msra.mxu0 %v838
  %933 = vmatpush.msra.mxu0 %v837
  %934 = vmatpush.msra.mxu0 %v836
  %935 = vmatpush.msra.mxu0 %v835
  %936 = vmatmul.f32.gmra.mxu0 %v918
  %v937 = vpop.f32.mrf.mxu0
  %v938 = vadd.f32 0.0, %v937
  %939 = vdwg.mxu0
  %v941 = vrot.slane %v938, 6
  %v943 = vadd.f32 %v830, %v941
  %v944 = vxor.u32 %v943, 2147483648
  %v945 = vmul.f32 %v944, 1.442695
  %v946 = vpow.pop %v945
  %v947 = vadd.f32 %v946, 1.0
  %v948 = vrcp.pop %v947
  %v949 = vmul.f32 %v947, %v948
  %v950 = vsub.f32 1.0, %v949
  %v951 = vmul.f32 %v948, %v950
  %v952 = vadd.f32 %v948, %v951
  %vm953 = vweird.f32 %v947
  %vm954 = vweird.f32 %v948
  %vm955 = vmor %vm953, %vm954
  %v956 = vsel %vm955, %v948, %v952
  %v957 = vand.u32 2147483647, %v947
  %vm958 = vcmp.eq.f32.partialorder %v957, 8.507059e+37
  %v959 = vand.u32 %v947, 2147483648
  %v960 = vor.u32 1.1754944e-38, %v959
  %v961 = vsel %vm958, %v960, %v956
  %v962 = vmul.f32 1.0, %v961
  %v963 = vadd.f32 %v938, %v889
  %v965 = vrot.slane %v963, 6
  %966 = vrot.lane.b32.xlu0 %v965, 64
  %v967 = vpop.permute.xlu0 %966
  %v969 = vmul.f32 %v962, %v967
  %971 = vrot.lane.b32.xlu0 %v969, 64
  %v972 = vpop.permute.xlu0 %971
  %v974 = vadd.f32 %v830, %v972
  %v975 = vtanh.pop %v974
  %v976 = vsub.f32 1.0, %v962
  %978 = vrot.lane.b32.xlu0 %v975, 96
  %v979 = vpop.permute.xlu0 %978
  %v981 = vmul.f32 %v976, %v979
  %v982 = vrot.slane %v911, 6
  %v984 = vmul.f32 %v962, %v982
  %v985 = vadd.f32 %v981, %v984
  %987 = vrot.lane.b32.xlu0 %v985, 96
  %v988 = vpop.permute.xlu0 %987
  %vm990 = vcmask 257026
  %991 = vst.msk [vmem:[#allocation2] sm:$0xc] %vm990, %v988
  %v992 = vrot.slane %v985, 2
  %993 = vrot.lane.b32.xlu0 %v992, 96
  %v994 = vpop.permute.xlu0 %993
  %v995 = vsel %vm52, %v994, 0
  %997 = vmatpush.msra.mxu0 0.0
  %998 = vmatpush.msra.mxu0 0.0
  %999 = vmatpush.msra.mxu0 0.0
  %1000 = vmatpush.msra.mxu0 0.0
  %1001 = vmatpush.msra.mxu0 0.0
  %1002 = vmatpush.msra.mxu0 0.0
  %1003 = vmatpush.msra.mxu0 0.0
  %1004 = vmatpush.msra.mxu0 0.0
  %1005 = vmatpush.msra.mxu0 0.0
  %1006 = vmatpush.msra.mxu0 0.0
  %1007 = vmatpush.msra.mxu0 0.0
  %1008 = vmatpush.msra.mxu0 0.0
  %1009 = vmatpush.msra.mxu0 %v838
  %1010 = vmatpush.msra.mxu0 %v837
  %1011 = vmatpush.msra.mxu0 %v836
  %1012 = vmatpush.msra.mxu0 %v835
  %1013 = vmatmul.f32.gmra.mxu0 %v995
  %v1014 = vpop.f32.mrf.mxu0
  %v1015 = vadd.f32 0.0, %v1014
  %1016 = vdwg.mxu0
  %v1018 = vrot.slane %v1015, 4
  %v1020 = vadd.f32 %v830, %v1018
  %v1021 = vxor.u32 %v1020, 2147483648
  %v1022 = vmul.f32 %v1021, 1.442695
  %v1023 = vpow.pop %v1022
  %v1024 = vadd.f32 %v1023, 1.0
  %v1025 = vrcp.pop %v1024
  %v1026 = vmul.f32 %v1024, %v1025
  %v1027 = vsub.f32 1.0, %v1026
  %v1028 = vmul.f32 %v1025, %v1027
  %v1029 = vadd.f32 %v1025, %v1028
  %vm1030 = vweird.f32 %v1024
  %vm1031 = vweird.f32 %v1025
  %vm1032 = vmor %vm1030, %vm1031
  %v1033 = vsel %vm1032, %v1025, %v1029
  %v1034 = vand.u32 2147483647, %v1024
  %vm1035 = vcmp.eq.f32.partialorder %v1034, 8.507059e+37
  %v1036 = vand.u32 %v1024, 2147483648
  %v1037 = vor.u32 1.1754944e-38, %v1036
  %v1038 = vsel %vm1035, %v1037, %v1033
  %v1039 = vmul.f32 1.0, %v1038
  %v1040 = vadd.f32 %v1015, %v889
  %v1042 = vrot.slane %v1040, 4
  %1043 = vrot.lane.b32.xlu0 %v1042, 64
  %v1044 = vpop.permute.xlu0 %1043
  %v1046 = vmul.f32 %v1039, %v1044
  %1048 = vrot.lane.b32.xlu0 %v1046, 64
  %v1049 = vpop.permute.xlu0 %1048
  %v1051 = vadd.f32 %v830, %v1049
  %v1052 = vtanh.pop %v1051
  %v1053 = vsub.f32 1.0, %v1039
  %1055 = vrot.lane.b32.xlu0 %v1052, 96
  %v1056 = vpop.permute.xlu0 %1055
  %v1058 = vmul.f32 %v1053, %v1056
  %v1059 = vrot.slane %v985, 6
  %v1061 = vmul.f32 %v1039, %v1059
  %v1062 = vadd.f32 %v1058, %v1061
  %1064 = vrot.lane.b32.xlu0 %v1062, 96
  %v1065 = vpop.permute.xlu0 %1064
  %vm1067 = vcmask 259076
  %1068 = vst.msk [vmem:[#allocation2] sm:$0x30] %vm1067, %v1065
  %v1069 = vrot.slane %v1062, 4
  %1070 = vrot.lane.b32.xlu0 %v1069, 96
  %v1071 = vpop.permute.xlu0 %1070
  %v1072 = vsel %vm52, %v1071, 0
  %1074 = vmatpush.msra.mxu0 0.0
  %1075 = vmatpush.msra.mxu0 0.0
  %1076 = vmatpush.msra.mxu0 0.0
  %1077 = vmatpush.msra.mxu0 0.0
  %1078 = vmatpush.msra.mxu0 0.0
  %1079 = vmatpush.msra.mxu0 0.0
  %1080 = vmatpush.msra.mxu0 0.0
  %1081 = vmatpush.msra.mxu0 0.0
  %1082 = vmatpush.msra.mxu0 0.0
  %1083 = vmatpush.msra.mxu0 0.0
  %1084 = vmatpush.msra.mxu0 0.0
  %1085 = vmatpush.msra.mxu0 0.0
  %1086 = vmatpush.msra.mxu0 %v838
  %1087 = vmatpush.msra.mxu0 %v837
  %1088 = vmatpush.msra.mxu0 %v836
  %1089 = vmatpush.msra.mxu0 %v835
  %1090 = vmatmul.f32.gmra.mxu0 %v1072
  %v1091 = vpop.f32.mrf.mxu0
  %v1092 = vadd.f32 0.0, %v1091
  %1093 = vdwg.mxu0
  %v1095 = vrot.slane %v1092, 2
  %v1097 = vadd.f32 %v830, %v1095
  %v1098 = vxor.u32 %v1097, 2147483648
  %v1099 = vmul.f32 %v1098, 1.442695
  %v1100 = vpow.pop %v1099
  %v1101 = vadd.f32 %v1100, 1.0
  %v1102 = vrcp.pop %v1101
  %v1103 = vmul.f32 %v1101, %v1102
  %v1104 = vsub.f32 1.0, %v1103
  %v1105 = vmul.f32 %v1102, %v1104
  %v1106 = vadd.f32 %v1102, %v1105
  %vm1107 = vweird.f32 %v1101
  %vm1108 = vweird.f32 %v1102
  %vm1109 = vmor %vm1107, %vm1108
  %v1110 = vsel %vm1109, %v1102, %v1106
  %v1111 = vand.u32 2147483647, %v1101
  %vm1112 = vcmp.eq.f32.partialorder %v1111, 8.507059e+37
  %v1113 = vand.u32 %v1101, 2147483648
  %v1114 = vor.u32 1.1754944e-38, %v1113
  %v1115 = vsel %vm1112, %v1114, %v1110
  %v1116 = vmul.f32 1.0, %v1115
  %v1117 = vadd.f32 %v1092, %v889
  %v1119 = vrot.slane %v1117, 2
  %1120 = vrot.lane.b32.xlu0 %v1119, 64
  %v1121 = vpop.permute.xlu0 %1120
  %v1123 = vmul.f32 %v1116, %v1121
  %1125 = vrot.lane.b32.xlu0 %v1123, 64
  %v1126 = vpop.permute.xlu0 %1125
  %v1128 = vadd.f32 %v830, %v1126
  %v1129 = vtanh.pop %v1128
  %v1130 = vsub.f32 1.0, %v1116
  %1132 = vrot.lane.b32.xlu0 %v1129, 96
  %v1133 = vpop.permute.xlu0 %1132
  %v1135 = vmul.f32 %v1130, %v1133
  %v1136 = vrot.slane %v1062, 6
  %v1138 = vmul.f32 %v1116, %v1136
  %v1139 = vadd.f32 %v1135, %v1138
  %1141 = vrot.lane.b32.xlu0 %v1139, 96
  %v1142 = vpop.permute.xlu0 %1141
  %vm1144 = vcmask 261126
  %1145 = vst.msk [vmem:[#allocation2] sm:$0xc0] %vm1144, %v1142
  %v1146 = vrot.slane %v1139, 6
  %1147 = vrot.lane.b32.xlu0 %v1146, 96
  %v1148 = vpop.permute.xlu0 %1147
  %v1149 = vsel %vm52, %v1148, 0
  %1151 = vmatpush.msra.mxu0 0.0
  %1152 = vmatpush.msra.mxu0 0.0
  %1153 = vmatpush.msra.mxu0 0.0
  %1154 = vmatpush.msra.mxu0 0.0
  %1155 = vmatpush.msra.mxu0 0.0
  %1156 = vmatpush.msra.mxu0 0.0
  %1157 = vmatpush.msra.mxu0 0.0
  %1158 = vmatpush.msra.mxu0 0.0
  %1159 = vmatpush.msra.mxu0 0.0
  %1160 = vmatpush.msra.mxu0 0.0
  %1161 = vmatpush.msra.mxu0 0.0
  %1162 = vmatpush.msra.mxu0 0.0
  %1163 = vmatpush.msra.mxu0 %v838
  %1164 = vmatpush.msra.mxu0 %v837
  %1165 = vmatpush.msra.mxu0 %v836
  %1166 = vmatpush.msra.mxu0 %v835
  %1167 = vmatmul.f32.gmra.mxu0 %v1149
  %v1168 = vpop.f32.mrf.mxu0
  %v1169 = vadd.f32 0.0, %v1168
  %1170 = vdwg.mxu0
  %v1171 = vadd.f32 %v833, %v1169
  %v1172 = vxor.u32 %v1171, 2147483648
  %v1173 = vmul.f32 %v1172, 1.442695
  %v1174 = vpow.pop %v1173
  %v1175 = vadd.f32 %v1174, 1.0
  %v1176 = vrcp.pop %v1175
  %v1177 = vmul.f32 %v1175, %v1176
  %v1178 = vsub.f32 1.0, %v1177
  %v1179 = vmul.f32 %v1176, %v1178
  %v1180 = vadd.f32 %v1176, %v1179
  %vm1181 = vweird.f32 %v1175
  %vm1182 = vweird.f32 %v1176
  %vm1183 = vmor %vm1181, %vm1182
  %v1184 = vsel %vm1183, %v1176, %v1180
  %v1185 = vand.u32 2147483647, %v1175
  %vm1186 = vcmp.eq.f32.partialorder %v1185, 8.507059e+37
  %v1187 = vand.u32 %v1175, 2147483648
  %v1188 = vor.u32 1.1754944e-38, %v1187
  %v1189 = vsel %vm1186, %v1188, %v1184
  %v1190 = vmul.f32 1.0, %v1189
  %v1191 = vadd.f32 %v1169, %v889
  %1193 = vrot.lane.b32.xlu0 %v1191, 64
  %v1194 = vpop.permute.xlu0 %1193
  %v1196 = vmul.f32 %v1190, %v1194
  %1198 = vrot.lane.b32.xlu0 %v1196, 64
  %v1199 = vpop.permute.xlu0 %1198
  %v1201 = vadd.f32 %v833, %v1199
  %v1202 = vtanh.pop %v1201
  %v1203 = vsub.f32 1.0, %v1190
  %1205 = vrot.lane.b32.xlu0 %v1202, 96
  %v1206 = vpop.permute.xlu0 %1205
  %v1208 = vmul.f32 %v1203, %v1206
  %v1210 = vmul.f32 %v1190, %v1146
  %v1211 = vadd.f32 %v1208, %v1210
  %1213 = vrot.lane.b32.xlu0 %v1211, 96
  %v1214 = vpop.permute.xlu0 %1213
  %1216 = vst.msk [vmem:[#allocation2 + $0x8] sm:$0x3] %vm916, %v1214
  %v1217 = vsel %vm52, %v1214, 0
  %1219 = vmatpush.msra.mxu0 0.0
  %1220 = vmatpush.msra.mxu0 0.0
  %1221 = vmatpush.msra.mxu0 0.0
  %1222 = vmatpush.msra.mxu0 0.0
  %1223 = vmatpush.msra.mxu0 0.0
  %1224 = vmatpush.msra.mxu0 0.0
  %1225 = vmatpush.msra.mxu0 0.0
  %1226 = vmatpush.msra.mxu0 0.0
  %1227 = vmatpush.msra.mxu0 0.0
  %1228 = vmatpush.msra.mxu0 0.0
  %1229 = vmatpush.msra.mxu0 0.0
  %1230 = vmatpush.msra.mxu0 0.0
  %1231 = vmatpush.msra.mxu0 %v838
  %1232 = vmatpush.msra.mxu0 %v837
  %1233 = vmatpush.msra.mxu0 %v836
  %1234 = vmatpush.msra.mxu0 %v835
  %1235 = vmatmul.f32.gmra.mxu0 %v1217
  %v1236 = vpop.f32.mrf.mxu0
  %v1237 = vadd.f32 0.0, %v1236
  %1238 = vdwg.mxu0
  %v1240 = vrot.slane %v1237, 6
  %v1242 = vadd.f32 %v833, %v1240
  %v1243 = vxor.u32 %v1242, 2147483648
  %v1244 = vmul.f32 %v1243, 1.442695
  %v1245 = vpow.pop %v1244
  %v1246 = vadd.f32 %v1245, 1.0
  %v1247 = vrcp.pop %v1246
  %v1248 = vmul.f32 %v1246, %v1247
  %v1249 = vsub.f32 1.0, %v1248
  %v1250 = vmul.f32 %v1247, %v1249
  %v1251 = vadd.f32 %v1247, %v1250
  %vm1252 = vweird.f32 %v1246
  %vm1253 = vweird.f32 %v1247
  %vm1254 = vmor %vm1252, %vm1253
  %v1255 = vsel %vm1254, %v1247, %v1251
  %v1256 = vand.u32 2147483647, %v1246
  %vm1257 = vcmp.eq.f32.partialorder %v1256, 8.507059e+37
  %v1258 = vand.u32 %v1246, 2147483648
  %v1259 = vor.u32 1.1754944e-38, %v1258
  %v1260 = vsel %vm1257, %v1259, %v1255
  %v1261 = vmul.f32 1.0, %v1260
  %v1262 = vadd.f32 %v1237, %v889
  %v1264 = vrot.slane %v1262, 6
  %1265 = vrot.lane.b32.xlu0 %v1264, 64
  %v1266 = vpop.permute.xlu0 %1265
  %v1268 = vmul.f32 %v1261, %v1266
  %1270 = vrot.lane.b32.xlu0 %v1268, 64
  %v1271 = vpop.permute.xlu0 %1270
  %v1273 = vadd.f32 %v833, %v1271
  %v1274 = vtanh.pop %v1273
  %v1275 = vsub.f32 1.0, %v1261
  %1277 = vrot.lane.b32.xlu0 %v1274, 96
  %v1278 = vpop.permute.xlu0 %1277
  %v1280 = vmul.f32 %v1275, %v1278
  %v1281 = vrot.slane %v1211, 6
  %v1283 = vmul.f32 %v1261, %v1281
  %v1284 = vadd.f32 %v1280, %v1283
  %1286 = vrot.lane.b32.xlu0 %v1284, 96
  %v1287 = vpop.permute.xlu0 %1286
  %1289 = vst.msk [vmem:[#allocation2 + $0x8] sm:$0xc] %vm990, %v1287
  %v1290 = vrot.slane %v1284, 2
  %1291 = vrot.lane.b32.xlu0 %v1290, 96
  %v1292 = vpop.permute.xlu0 %1291
  %v1293 = vsel %vm52, %v1292, 0
  %1295 = vmatpush.msra.mxu0 0.0
  %1296 = vmatpush.msra.mxu0 0.0
  %1297 = vmatpush.msra.mxu0 0.0
  %1298 = vmatpush.msra.mxu0 0.0
  %1299 = vmatpush.msra.mxu0 0.0
  %1300 = vmatpush.msra.mxu0 0.0
  %1301 = vmatpush.msra.mxu0 0.0
  %1302 = vmatpush.msra.mxu0 0.0
  %1303 = vmatpush.msra.mxu0 0.0
  %1304 = vmatpush.msra.mxu0 0.0
  %1305 = vmatpush.msra.mxu0 0.0
  %1306 = vmatpush.msra.mxu0 0.0
  %1307 = vmatpush.msra.mxu0 %v838
  %1308 = vmatpush.msra.mxu0 %v837
  %1309 = vmatpush.msra.mxu0 %v836
  %1310 = vmatpush.msra.mxu0 %v835
  %1311 = vmatmul.f32.gmra.mxu0 %v1293
  %v1312 = vpop.f32.mrf.mxu0
  %v1313 = vadd.f32 0.0, %v1312
  %1314 = vdwg.mxu0
  %v1316 = vrot.slane %v1313, 4
  %v1318 = vadd.f32 %v833, %v1316
  %v1319 = vxor.u32 %v1318, 2147483648
  %v1320 = vmul.f32 %v1319, 1.442695
  %v1321 = vpow.pop %v1320
  %v1322 = vadd.f32 %v1321, 1.0
  %v1323 = vrcp.pop %v1322
  %v1324 = vmul.f32 %v1322, %v1323
  %v1325 = vsub.f32 1.0, %v1324
  %v1326 = vmul.f32 %v1323, %v1325
  %v1327 = vadd.f32 %v1323, %v1326
  %vm1328 = vweird.f32 %v1322
  %vm1329 = vweird.f32 %v1323
  %vm1330 = vmor %vm1328, %vm1329
  %v1331 = vsel %vm1330, %v1323, %v1327
  %v1332 = vand.u32 2147483647, %v1322
  %vm1333 = vcmp.eq.f32.partialorder %v1332, 8.507059e+37
  %v1334 = vand.u32 %v1322, 2147483648
  %v1335 = vor.u32 1.1754944e-38, %v1334
  %v1336 = vsel %vm1333, %v1335, %v1331
  %v1337 = vmul.f32 1.0, %v1336
  %v1338 = vadd.f32 %v1313, %v889
  %v1340 = vrot.slane %v1338, 4
  %1341 = vrot.lane.b32.xlu0 %v1340, 64
  %v1342 = vpop.permute.xlu0 %1341
  %v1344 = vmul.f32 %v1337, %v1342
  %1346 = vrot.lane.b32.xlu0 %v1344, 64
  %v1347 = vpop.permute.xlu0 %1346
  %v1349 = vadd.f32 %v833, %v1347
  %v1350 = vtanh.pop %v1349
  %v1351 = vsub.f32 1.0, %v1337
  %1353 = vrot.lane.b32.xlu0 %v1350, 96
  %v1354 = vpop.permute.xlu0 %1353
  %v1356 = vmul.f32 %v1351, %v1354
  %v1357 = vrot.slane %v1284, 6
  %v1359 = vmul.f32 %v1337, %v1357
  %v1360 = vadd.f32 %v1356, %v1359
  %1362 = vrot.lane.b32.xlu0 %v1360, 96
  %v1363 = vpop.permute.xlu0 %1362
  %1365 = vst.msk [vmem:[#allocation2 + $0x8] sm:$0x30] %vm1067, %v1363
  %v1366 = vrot.slane %v1360, 4
  %1367 = vrot.lane.b32.xlu0 %v1366, 96
  %v1368 = vpop.permute.xlu0 %1367
  %v1369 = vsel %vm52, %v1368, 0
  %1371 = vmatpush.msra.mxu0 0.0
  %1372 = vmatpush.msra.mxu0 0.0
  %1373 = vmatpush.msra.mxu0 0.0
  %1374 = vmatpush.msra.mxu0 0.0
  %1375 = vmatpush.msra.mxu0 0.0
  %1376 = vmatpush.msra.mxu0 0.0
  %1377 = vmatpush.msra.mxu0 0.0
  %1378 = vmatpush.msra.mxu0 0.0
  %1379 = vmatpush.msra.mxu0 0.0
  %1380 = vmatpush.msra.mxu0 0.0
  %1381 = vmatpush.msra.mxu0 0.0
  %1382 = vmatpush.msra.mxu0 0.0
  %1383 = vmatpush.msra.mxu0 %v838
  %1384 = vmatpush.msra.mxu0 %v837
  %1385 = vmatpush.msra.mxu0 %v836
  %1386 = vmatpush.msra.mxu0 %v835
  %1387 = vmatmul.f32.gmra.mxu0 %v1369
  %v1388 = vpop.f32.mrf.mxu0
  %v1389 = vadd.f32 0.0, %v1388
  %1390 = vdwg.mxu0
  %v1392 = vrot.slane %v1389, 2
  %v1394 = vadd.f32 %v833, %v1392
  %v1395 = vxor.u32 %v1394, 2147483648
  %v1396 = vmul.f32 %v1395, 1.442695
  %v1397 = vpow.pop %v1396
  %v1398 = vadd.f32 %v1397, 1.0
  %v1399 = vrcp.pop %v1398
  %v1400 = vmul.f32 %v1398, %v1399
  %v1401 = vsub.f32 1.0, %v1400
  %v1402 = vmul.f32 %v1399, %v1401
  %v1403 = vadd.f32 %v1399, %v1402
  %vm1404 = vweird.f32 %v1398
  %vm1405 = vweird.f32 %v1399
  %vm1406 = vmor %vm1404, %vm1405
  %v1407 = vsel %vm1406, %v1399, %v1403
  %v1408 = vand.u32 2147483647, %v1398
  %vm1409 = vcmp.eq.f32.partialorder %v1408, 8.507059e+37
  %v1410 = vand.u32 %v1398, 2147483648
  %v1411 = vor.u32 1.1754944e-38, %v1410
  %v1412 = vsel %vm1409, %v1411, %v1407
  %v1413 = vmul.f32 1.0, %v1412
  %v1414 = vadd.f32 %v1389, %v889
  %v1416 = vrot.slane %v1414, 2
  %1417 = vrot.lane.b32.xlu0 %v1416, 64
  %v1418 = vpop.permute.xlu0 %1417
  %v1420 = vmul.f32 %v1413, %v1418
  %1422 = vrot.lane.b32.xlu0 %v1420, 64
  %v1423 = vpop.permute.xlu0 %1422
  %v1425 = vadd.f32 %v833, %v1423
  %v1426 = vtanh.pop %v1425
  %v1427 = vsub.f32 1.0, %v1413
  %1429 = vrot.lane.b32.xlu0 %v1426, 96
  %v1430 = vpop.permute.xlu0 %1429
  %v1432 = vmul.f32 %v1427, %v1430
  %v1433 = vrot.slane %v1360, 6
  %v1435 = vmul.f32 %v1413, %v1433
  %v1436 = vadd.f32 %v1432, %v1435
  %1438 = vrot.lane.b32.xlu0 %v1436, 96
  %v1439 = vpop.permute.xlu0 %1438
  %1441 = vst.msk [vmem:[#allocation2 + $0x8] sm:$0xc0] %vm1144, %v1439
  %v1442 = vld [vmem:[#allocation2] sm:$0xff]
  %v1443 = vld [vmem:[#allocation2 + $0x8] sm:$0xff]
  %v1444 = vld [vmem:[%s10] sm:$0xff]
  %v1445 = vld [vmem:[%s10 + $0x8] sm:$0xff]
  %v1446 = vld [vmem:[%s10 + $0x10] sm:$0xff]
  %v1447 = vld [vmem:[%s10 + $0x18] sm:$0xff]
  %v1448 = vld [vmem:[%s11] sm:$0x1]
  %v1450 = vperm.slane %v1448, 0
  %v1453 = vsel %vm52, %v1442, 0
  %v1456 = vsel %vm52, %v1443, 0
  %1458 = vmatpush.msra.mxu0 0.0
  %1459 = vmatpush.msra.mxu0 0.0
  %1460 = vmatpush.msra.mxu0 0.0
  %1461 = vmatpush.msra.mxu0 0.0
  %1462 = vmatpush.msra.mxu0 0.0
  %1463 = vmatpush.msra.mxu0 0.0
  %1464 = vmatpush.msra.mxu0 0.0
  %1465 = vmatpush.msra.mxu0 0.0
  %1466 = vmatpush.msra.mxu0 0.0
  %1467 = vmatpush.msra.mxu0 0.0
  %1468 = vmatpush.msra.mxu0 0.0
  %1469 = vmatpush.msra.mxu0 0.0
  %1470 = vmatpush.msra.mxu0 %v1447
  %1471 = vmatpush.msra.mxu0 %v1446
  %1472 = vmatpush.msra.mxu0 %v1445
  %1473 = vmatpush.msra.mxu0 %v1444
  %1474 = vmatmul.f32.gmra.mxu0 %v1453
  %v1475 = vpop.f32.mrf.mxu0
  %v1476 = vadd.f32 %v1450, %v1475
  %1477 = vmatmul.f32.gmra.mxu0 %v1456
  %v1478 = vpop.f32.mrf.mxu0
  %v1479 = vadd.f32 %v1450, %v1478
  %1480 = vdwg.mxu0
  %1481 = vst [vmem:[%s12] sm:$0xff] %v1476
  %1482 = vst [vmem:[%s12 + $0x8] sm:$0xff] %v1479
  // Predicated region
  $region50: #{date_normalizer_forward.1} parent=0 // pred_check
    _
  $region51: #{date_normalizer_forward.1} parent=0 // pred_check_branch
    %1484 = sbr.rel (0) target = $region53
  $region52: #{date_normalizer_forward.1} parent=0 // pred_region
    _
  $region53: #{date_normalizer_forward.1} parent=0 // pred_fallthru
    _
  // Predicated region
  $region54: #{date_normalizer_forward.1} parent=0 // pred_check
    _
  $region55: #{date_normalizer_forward.1} parent=0 // pred_check_branch
    %1486 = sbr.rel (0) target = $region57
  $region56: #{date_normalizer_forward.1} parent=0 // pred_region
    _
  $region57: #{date_normalizer_forward.1} parent=0 // pred_fallthru
    _

</llo_original>
